<compile_context>
chip_gen: v6e
topology: v6e:2x2x1
jax: 0.10.0
libtpu: 0.0.40
codegen_flags: <defaults>
</compile_context>

<pallas_src>
import functools

import jax
import jax.numpy as jnp
import numpy as np
from jax import lax
from jax.experimental import pallas as pl
from jax.experimental.pallas import tpu as pltpu

LANE = 128
SUBLANE = 8

# Packed gate-block order inside the G = 4*H lane tile.  PyTorch nn.GRU packs
# its weight rows as [r | z | n] (torch gates 0, 1, 2); we place them at lane
# blocks [z | n | r | n] (the n gate is duplicated into the spare 4th block).
_BLOCK_TO_TORCH_GATE = (1, 2, 0, 2)


def _round_up(x, m):
    return ((x + m - 1) // m) * m


# --------------------------------------------------------------------------
# Fused kernel: all GRU layers + classifier in one pallas_call.
# --------------------------------------------------------------------------
def _make_fused_gru_kernel(num_layers, T, B_pad, H, H_pad, G):
    unroll = True if T <= 16 else 8

    def kernel(*refs):
        x_ref = refs[0]                               # (T, B_pad, D_pad)  bf16
        layer_refs = refs[1:1 + 4 * num_layers]       # w_ih, w_hh, bias_i, b_hn
        cls_w_ref = refs[1 + 4 * num_layers]          # (H_pad, N_pad)     f32
        cls_b_ref = refs[2 + 4 * num_layers]          # (1, N_pad)         f32
        logits_ref = refs[3 + 4 * num_layers]         # (B_pad, N_pad)     f32 out
        gi_scratch = refs[4 + 4 * num_layers]         # (T, B_pad, G)      f32
        seq_scratch = refs[5 + 4 * num_layers]        # (T, B_pad, H_pad)  bf16

        h_last = jnp.zeros((B_pad, G), jnp.float32)
        for layer in range(num_layers):
            w_ih_ref = layer_refs[4 * layer]          # (D_pad|H_pad, G)  bf16
            w_hh_ref = layer_refs[4 * layer + 1]      # (H_pad, G)        bf16
            bias_i = layer_refs[4 * layer + 2][...]   # (1, G) f32: b_ih + b_hz/b_hr
            b_hn = layer_refs[4 * layer + 3][...]     # (1, G) f32: b_hn on n blocks

            # Layer input: padded bf16 x for layer 0, previous layer's
            # VMEM-resident hidden sequence otherwise.
            x_all = x_ref[...] if layer == 0 else seq_scratch[...]
            d_in = x_all.shape[-1]

            # Hoisted input projection over the whole sequence (off the serial
            # chain): bf16 MXU operands, f32 accumulate; the r/z recurrent
            # biases are folded in here once per layer.
            gi_all = jnp.dot(x_all.reshape(T * B_pad, d_in), w_ih_ref[...],
                             preferred_element_type=jnp.float32) + bias_i
            gi_scratch[...] = gi_all.reshape(T, B_pad, G)

            is_last_layer = layer == num_layers - 1

            def step(t, h_prev):
                gi = gi_scratch[t]                                 # (B_pad, G) f32
                # Recurrent matmul: bf16 operands, f32 accumulate.  w_hh is
                # re-streamed from VMEM each step instead of being held live
                # across the unrolled loop (keeps the body spill-free).
                gh = jnp.dot(h_prev[:, :H_pad].astype(jnp.bfloat16),
                             w_hh_ref[...],
                             preferred_element_type=jnp.float32) + b_hn
                sig = jax.nn.sigmoid(gi + gh)        # z @ [0,H), r @ [2H,3H)
                # Roll by H lanes: r lands on an n block (the n gate sits at
                # both [H,2H) and [3H,4H)); the second identical roll brings
                # the resulting n back to lanes [0,H).  Both rolls are XLU ops.
                r_mv = pltpu.roll(sig, shift=H, axis=1)
                n_all = jnp.tanh(gi + r_mv * gh)
                n_mv = pltpu.roll(n_all, shift=H, axis=1)
                # h' = (1 - z)*n + z*h, lane-wise; only lanes [0,H) are real.
                # Junk lanes stay a convex combination of bounded values, only
                # ever multiply zero-padded weight rows downstream, and are
                # sliced away at the end, so no mask is needed on the chain.
                h_new = n_mv + sig * (h_prev - n_mv)
                if not is_last_layer:
                    seq_scratch[t] = h_new[:, :H_pad].astype(jnp.bfloat16)
                return h_new

            h_last = lax.fori_loop(0, T, step,
                                   jnp.zeros((B_pad, G), jnp.float32),
                                   unroll=unroll)

        # Fused classifier head; lane-dense padded output (real logits in :2).
        logits_ref[...] = jnp.dot(h_last[:, :H_pad], cls_w_ref[...],
                                  preferred_element_type=jnp.float32) + cls_b_ref[...]

    return kernel


# --------------------------------------------------------------------------
# Parameter construction (PyTorch-style) and one-time layout packing.
# --------------------------------------------------------------------------
def init_params(key, input_dim, hidden_dim, num_layers):
    """PyTorch-style GRU/Linear parameters (same shapes as nn.GRU / nn.Linear)."""
    k = 1.0 / float(np.sqrt(hidden_dim))
    params = {"gru": []}
    for layer in range(num_layers):
        in_dim = input_dim if layer == 0 else hidden_dim
        key, k1, k2, k3, k4 = jax.random.split(key, 5)
        w_ih = jax.random.uniform(k1, (3 * hidden_dim, in_dim), jnp.float32, -k, k)
        w_hh = jax.random.uniform(k2, (3 * hidden_dim, hidden_dim), jnp.float32, -k, k)
        b_ih = jax.random.uniform(k3, (3 * hidden_dim,), jnp.float32, -k, k)
        b_hh = jax.random.uniform(k4, (3 * hidden_dim,), jnp.float32, -k, k)
        params["gru"].append((w_ih, w_hh, b_ih, b_hh))
    key, k5, k6 = jax.random.split(key, 3)
    params["cls_w"] = jax.random.uniform(k5, (2, hidden_dim), jnp.float32, -k, k)
    params["cls_b"] = jax.random.uniform(k6, (2,), jnp.float32, -k, k)
    return params


def prepare_params(params, input_dim, hidden_dim):
    """One-time packing: transpose, gate-pack, zero-pad, pre-cast to bf16."""
    H = hidden_dim
    if (4 * H) % LANE != 0:
        # TODO(synk): the packed [z|n|r|n] layout assumes 4*H is lane-aligned;
        # fall back to per-gate 128-lane blocks for other hidden sizes.
        raise NotImplementedError("hidden_dim must be a multiple of 32")
    G = 4 * H
    Hp = _round_up(H, LANE)
    Dp = _round_up(input_dim, LANE)
    Np = LANE  # classifier output padded to one full lane tile

    def pack_w(w, d_pad):
        # PyTorch (3H, d_in) -> (d_pad, G) with lane blocks [z | n | r | n].
        d_in = w.shape[1]
        out = jnp.zeros((d_pad, G), jnp.float32)
        for blk, g in enumerate(_BLOCK_TO_TORCH_GATE):
            out = out.at[:d_in, blk * H:(blk + 1) * H].set(w[g * H:(g + 1) * H, :].T)
        return out.astype(jnp.bfloat16)

    def pack_b(b, torch_gates):
        out = jnp.zeros((1, G), jnp.float32)
        for blk, g in enumerate(_BLOCK_TO_TORCH_GATE):
            if g in torch_gates:
                out = out.at[0, blk * H:(blk + 1) * H].set(b[g * H:(g + 1) * H])
        return out

    flat = []
    for layer, (w_ih, w_hh, b_ih, b_hh) in enumerate(params["gru"]):
        d_pad = Dp if layer == 0 else Hp
        bias_i = pack_b(b_ih, (0, 1, 2)) + pack_b(b_hh, (0, 1))  # b_hr/b_hz folded
        b_hn = pack_b(b_hh, (2,))                                # per-step n bias
        flat.extend([pack_w(w_ih, d_pad), pack_w(w_hh, Hp), bias_i, b_hn])

    cls_w = jnp.zeros((Hp, Np), jnp.float32).at[:H, :2].set(params["cls_w"].T)
    cls_b = jnp.zeros((1, Np), jnp.float32).at[0, :2].set(params["cls_b"])
    return {"flat": tuple(flat), "cls_w": cls_w, "cls_b": cls_b,
            "G": G, "H_pad": Hp, "D_pad": Dp, "N_pad": Np,
            "num_layers": len(params["gru"]),
            "hidden_dim": H, "input_dim": input_dim}


# --------------------------------------------------------------------------
# Forward wrapper.
# --------------------------------------------------------------------------
def longitudinal_rnn_forward(x_btd, prepped):
    """Equivalent of LongitudinalRNN.forward (bidirectional=False, eval mode).

    x_btd: (B, T, D_in) batch_first input.  Returns logits (B, 2) float32.
    """
    B, T, D = x_btd.shape
    H = prepped["hidden_dim"]
    G, Hp, Dp, Np = prepped["G"], prepped["H_pad"], prepped["D_pad"], prepped["N_pad"]
    L = prepped["num_layers"]
    Bp = _round_up(max(B, 1), SUBLANE)

    # Single materialization: transpose to time-major, cast to bf16, zero-pad.
    # Padded D columns must stay exactly zero (they multiply zeroed weight rows).
    x_pad = jnp.pad(jnp.transpose(x_btd, (1, 0, 2)).astype(jnp.bfloat16),
                    ((0, 0), (0, Bp - B), (0, Dp - D)))

    kernel = _make_fused_gru_kernel(L, T, Bp, H, Hp, G)
    n_inputs = 1 + 4 * L + 2

    # Advisory cost estimate so XLA schedules the producer ops around the call.
    flops = 2 * Bp * Hp * Np
    for layer in range(L):
        d_in = Dp if layer == 0 else Hp
        flops += 2 * T * Bp * d_in * G      # hoisted input projection
        flops += 2 * T * Bp * Hp * G        # recurrent matmul chain
    transcendentals = 2 * L * T * Bp * G
    bytes_accessed = int(
        x_pad.size * x_pad.dtype.itemsize
        + sum(int(np.prod(a.shape)) * a.dtype.itemsize for a in prepped["flat"])
        + prepped["cls_w"].size * 4 + prepped["cls_b"].size * 4
        + Bp * Np * 4)

    logits_pad = pl.pallas_call(
        kernel,
        out_shape=jax.ShapeDtypeStruct((Bp, Np), jnp.float32),
        in_specs=[pl.BlockSpec(memory_space=pltpu.MemorySpace.VMEM)
                  for _ in range(n_inputs)],
        out_specs=pl.BlockSpec(memory_space=pltpu.MemorySpace.VMEM),
        scratch_shapes=[pltpu.VMEM((T, Bp, G), jnp.float32),     # hoisted gate inputs
                        pltpu.VMEM((T, Bp, Hp), jnp.bfloat16)],  # inter-layer h sequence
        cost_estimate=pl.CostEstimate(flops=int(flops),
                                      transcendentals=int(transcendentals),
                                      bytes_accessed=bytes_accessed),
    )(x_pad, *prepped["flat"], prepped["cls_w"], prepped["cls_b"])

    return logits_pad[:B, :2]


# --------------------------------------------------------------------------
# Pure-JAX reference (f32, PyTorch gate order) for a cheap correctness check.
# --------------------------------------------------------------------------
def _reference_forward(x_btd, params):
    hp = functools.partial(jnp.dot, precision=lax.Precision.HIGHEST)
    x = jnp.transpose(x_btd, (1, 0, 2)).astype(jnp.float32)   # (T, B, D)
    T, B, _ = x.shape
    H = params["gru"][0][1].shape[1]
    h_in = x
    h_last = None
    for (w_ih, w_hh, b_ih, b_hh) in params["gru"]:
        h = jnp.zeros((B, H), jnp.float32)
        outs = []
        for t in range(T):
            gi = hp(h_in[t], w_ih.T) + b_ih
            gh = hp(h, w_hh.T) + b_hh
            r = jax.nn.sigmoid(gi[:, :H] + gh[:, :H])
            z = jax.nn.sigmoid(gi[:, H:2 * H] + gh[:, H:2 * H])
            n = jnp.tanh(gi[:, 2 * H:] + r * gh[:, 2 * H:])
            h = (1.0 - z) * n + z * h
            outs.append(h)
        h_in = jnp.stack(outs)
        h_last = h
    return hp(h_last, params["cls_w"].T) + params["cls_b"]


if __name__ == "__main__":
    B, T, D_IN, HIDDEN, NUM_LAYERS = 2, 8, 16, 32, 2

    key = jax.random.PRNGKey(0)
    key, kp, kx = jax.random.split(key, 3)
    params = init_params(kp, D_IN, HIDDEN, NUM_LAYERS)
    prepped = prepare_params(params, D_IN, HIDDEN)
    x = jax.random.normal(kx, (B, T, D_IN), jnp.float32)

    logits = longitudinal_rnn_forward(x, prepped)
    logits = jax.block_until_ready(logits)

    assert logits.shape == (B, 2), logits.shape
    assert logits.dtype == jnp.float32

    ref = jax.block_until_ready(_reference_forward(x, params))
    np.testing.assert_allclose(np.asarray(logits), np.asarray(ref),
                               rtol=2e-2, atol=2e-2)
    print("KERNEL_OK")
</pallas_src>

<mosaic_0001>
module attributes {stable_mosaic.version = 11 : i64} {
  func.func @kernel(%arg0: memref<8x8x128xbf16, #tpu.memory_space<vmem>>, %arg1: memref<128x128xbf16, #tpu.memory_space<vmem>>, %arg2: memref<128x128xbf16, #tpu.memory_space<vmem>>, %arg3: memref<1x128xf32, #tpu.memory_space<vmem>>, %arg4: memref<1x128xf32, #tpu.memory_space<vmem>>, %arg5: memref<128x128xbf16, #tpu.memory_space<vmem>>, %arg6: memref<128x128xbf16, #tpu.memory_space<vmem>>, %arg7: memref<1x128xf32, #tpu.memory_space<vmem>>, %arg8: memref<1x128xf32, #tpu.memory_space<vmem>>, %arg9: memref<128x128xf32, #tpu.memory_space<vmem>>, %arg10: memref<1x128xf32, #tpu.memory_space<vmem>>, %arg11: memref<8x128xf32, #tpu.memory_space<vmem>>, %arg12: memref<8x8x128xf32, #tpu.memory_space<vmem>>, %arg13: memref<8x8x128xbf16, #tpu.memory_space<vmem>>) attributes {dimension_semantics = [], scalar_prefetch = 0 : i64, scratch_operands = 2 : i64, tpu.core_type = #tpu.core_type<tc>} {
    %c0 = arith.constant 0 : index
    %c0_0 = arith.constant 0 : index
    %0 = vector.load %arg3[%c0, %c0_0] : memref<1x128xf32, #tpu.memory_space<vmem>>, vector<1x128xf32>
    %c0_1 = arith.constant 0 : index
    %c0_2 = arith.constant 0 : index
    %1 = vector.load %arg4[%c0_1, %c0_2] : memref<1x128xf32, #tpu.memory_space<vmem>>, vector<1x128xf32>
    %c0_3 = arith.constant 0 : index
    %c0_4 = arith.constant 0 : index
    %c0_5 = arith.constant 0 : index
    %2 = vector.load %arg0[%c0_3, %c0_4, %c0_5] : memref<8x8x128xbf16, #tpu.memory_space<vmem>>, vector<8x8x128xbf16>
    %3 = vector.shape_cast %2 : vector<8x8x128xbf16> to vector<64x128xbf16>
    %c0_6 = arith.constant 0 : index
    %c0_7 = arith.constant 0 : index
    %4 = vector.load %arg1[%c0_6, %c0_7] : memref<128x128xbf16, #tpu.memory_space<vmem>>, vector<128x128xbf16>
    %cst = arith.constant dense<0.000000e+00> : vector<64x128xf32>
    %5 = tpu.matmul %3, %4, %cst {dimension_numbers = #tpu.dot_dimension_numbers<[1], [0], [0], [1], [0, 0, 1, 1], [], []>} : vector<64x128xbf16>, vector<128x128xbf16>, vector<64x128xf32> -> vector<64x128xf32>
    %6 = vector.broadcast %0 : vector<1x128xf32> to vector<64x128xf32>
    %7 = arith.addf %5, %6 : vector<64x128xf32>
    %8 = vector.shape_cast %7 : vector<64x128xf32> to vector<8x8x128xf32>
    %c0_8 = arith.constant 0 : index
    %c0_9 = arith.constant 0 : index
    %c0_10 = arith.constant 0 : index
    %9 = vector.load %arg12[%c0_8, %c0_9, %c0_10] : memref<8x8x128xf32, #tpu.memory_space<vmem>>, vector<8x8x128xf32>
    tpu.vector_store %arg12[%c0_8, %c0_9, %c0_10], %8 {strides = array<i32>} : memref<8x8x128xf32, #tpu.memory_space<vmem>>, vector<8x8x128xf32>,
    %cst_11 = arith.constant 0.000000e+00 : f32
    %10 = vector.broadcast %cst_11 : f32 to vector<8x128xf32>
    %c0_i32 = arith.constant 0 : i32
    %11 = arith.index_cast %c0_i32 : i32 to index
    %c0_12 = arith.constant 0 : index
    %c0_13 = arith.constant 0 : index
    %12 = vector.load %arg12[%11, %c0_12, %c0_13] : memref<8x8x128xf32, #tpu.memory_space<vmem>>, vector<1x8x128xf32>
    %13 = vector.shape_cast %12 : vector<1x8x128xf32> to vector<8x128xf32>
    %14 = arith.truncf %10 : vector<8x128xf32> to vector<8x128xbf16>
    %c0_14 = arith.constant 0 : index
    %c0_15 = arith.constant 0 : index
    %15 = vector.load %arg2[%c0_14, %c0_15] : memref<128x128xbf16, #tpu.memory_space<vmem>>, vector<128x128xbf16>
    %cst_16 = arith.constant dense<0.000000e+00> : vector<8x128xf32>
    %16 = tpu.matmul %14, %15, %cst_16 {dimension_numbers = #tpu.dot_dimension_numbers<[1], [0], [0], [1], [0, 0, 1, 1], [], []>} : vector<8x128xbf16>, vector<128x128xbf16>, vector<8x128xf32> -> vector<8x128xf32>
    %17 = vector.broadcast %1 : vector<1x128xf32> to vector<8x128xf32>
    %18 = arith.addf %16, %17 : vector<8x128xf32>
    %19 = arith.addf %13, %18 : vector<8x128xf32>
    %20 = arith.negf %19 : vector<8x128xf32>
    %21 = math.exp %20 : vector<8x128xf32>
    %cst_17 = arith.constant 1.000000e+00 : f32
    %22 = vector.broadcast %cst_17 : f32 to vector<8x128xf32>
    %23 = arith.addf %22, %21 : vector<8x128xf32>
    %24 = arith.divf %22, %23 : vector<8x128xf32>
    %c32_i32 = arith.constant 32 : i32
    %25 = tpu.dynamic_rotate %24 by %c32_i32 dim 1 : vector<8x128xf32>, i32 -> vector<8x128xf32>
    %26 = arith.mulf %25, %18 : vector<8x128xf32>
    %27 = arith.addf %13, %26 : vector<8x128xf32>
    %28 = math.tanh %27 : vector<8x128xf32>
    %c32_i32_18 = arith.constant 32 : i32
    %29 = tpu.dynamic_rotate %28 by %c32_i32_18 dim 1 : vector<8x128xf32>, i32 -> vector<8x128xf32>
    %30 = arith.subf %10, %29 : vector<8x128xf32>
    %31 = arith.mulf %24, %30 : vector<8x128xf32>
    %32 = arith.addf %29, %31 : vector<8x128xf32>
    %33 = arith.truncf %32 : vector<8x128xf32> to vector<8x128xbf16>
    %34 = arith.index_cast %c0_i32 : i32 to index
    %c0_19 = arith.constant 0 : index
    %c0_20 = arith.constant 0 : index
    %35 = vector.load %arg13[%34, %c0_19, %c0_20] : memref<8x8x128xbf16, #tpu.memory_space<vmem>>, vector<1x8x128xbf16>
    %36 = vector.shape_cast %35 : vector<1x8x128xbf16> to vector<8x128xbf16>
    %37 = vector.shape_cast %33 : vector<8x128xbf16> to vector<1x8x128xbf16>
    tpu.vector_store %arg13[%34, %c0_19, %c0_20], %37 {strides = array<i32>} : memref<8x8x128xbf16, #tpu.memory_space<vmem>>, vector<1x8x128xbf16>,
    %c1_i32 = arith.constant 1 : i32
    %38 = arith.index_cast %c1_i32 : i32 to index
    %c0_21 = arith.constant 0 : index
    %c0_22 = arith.constant 0 : index
    %39 = vector.load %arg12[%38, %c0_21, %c0_22] : memref<8x8x128xf32, #tpu.memory_space<vmem>>, vector<1x8x128xf32>
    %40 = vector.shape_cast %39 : vector<1x8x128xf32> to vector<8x128xf32>
    %41 = arith.truncf %32 : vector<8x128xf32> to vector<8x128xbf16>
    %c0_23 = arith.constant 0 : index
    %c0_24 = arith.constant 0 : index
    %42 = vector.load %arg2[%c0_23, %c0_24] : memref<128x128xbf16, #tpu.memory_space<vmem>>, vector<128x128xbf16>
    %cst_25 = arith.constant dense<0.000000e+00> : vector<8x128xf32>
    %43 = tpu.matmul %41, %42, %cst_25 {dimension_numbers = #tpu.dot_dimension_numbers<[1], [0], [0], [1], [0, 0, 1, 1], [], []>} : vector<8x128xbf16>, vector<128x128xbf16>, vector<8x128xf32> -> vector<8x128xf32>
    %44 = vector.broadcast %1 : vector<1x128xf32> to vector<8x128xf32>
    %45 = arith.addf %43, %44 : vector<8x128xf32>
    %46 = arith.addf %40, %45 : vector<8x128xf32>
    %47 = arith.negf %46 : vector<8x128xf32>
    %48 = math.exp %47 : vector<8x128xf32>
    %cst_26 = arith.constant 1.000000e+00 : f32
    %49 = vector.broadcast %cst_26 : f32 to vector<8x128xf32>
    %50 = arith.addf %49, %48 : vector<8x128xf32>
    %51 = arith.divf %49, %50 : vector<8x128xf32>
    %c32_i32_27 = arith.constant 32 : i32
    %52 = tpu.dynamic_rotate %51 by %c32_i32_27 dim 1 : vector<8x128xf32>, i32 -> vector<8x128xf32>
    %53 = arith.mulf %52, %45 : vector<8x128xf32>
    %54 = arith.addf %40, %53 : vector<8x128xf32>
    %55 = math.tanh %54 : vector<8x128xf32>
    %c32_i32_28 = arith.constant 32 : i32
    %56 = tpu.dynamic_rotate %55 by %c32_i32_28 dim 1 : vector<8x128xf32>, i32 -> vector<8x128xf32>
    %57 = arith.subf %32, %56 : vector<8x128xf32>
    %58 = arith.mulf %51, %57 : vector<8x128xf32>
    %59 = arith.addf %56, %58 : vector<8x128xf32>
    %60 = arith.truncf %59 : vector<8x128xf32> to vector<8x128xbf16>
    %61 = arith.index_cast %c1_i32 : i32 to index
    %c0_29 = arith.constant 0 : index
    %c0_30 = arith.constant 0 : index
    %62 = vector.load %arg13[%61, %c0_29, %c0_30] : memref<8x8x128xbf16, #tpu.memory_space<vmem>>, vector<1x8x128xbf16>
    %63 = vector.shape_cast %62 : vector<1x8x128xbf16> to vector<8x128xbf16>
    %64 = vector.shape_cast %60 : vector<8x128xbf16> to vector<1x8x128xbf16>
    tpu.vector_store %arg13[%61, %c0_29, %c0_30], %64 {strides = array<i32>} : memref<8x8x128xbf16, #tpu.memory_space<vmem>>, vector<1x8x128xbf16>,
    %c2_i32 = arith.constant 2 : i32
    %65 = arith.index_cast %c2_i32 : i32 to index
    %c0_31 = arith.constant 0 : index
    %c0_32 = arith.constant 0 : index
    %66 = vector.load %arg12[%65, %c0_31, %c0_32] : memref<8x8x128xf32, #tpu.memory_space<vmem>>, vector<1x8x128xf32>
    %67 = vector.shape_cast %66 : vector<1x8x128xf32> to vector<8x128xf32>
    %68 = arith.truncf %59 : vector<8x128xf32> to vector<8x128xbf16>
    %c0_33 = arith.constant 0 : index
    %c0_34 = arith.constant 0 : index
    %69 = vector.load %arg2[%c0_33, %c0_34] : memref<128x128xbf16, #tpu.memory_space<vmem>>, vector<128x128xbf16>
    %cst_35 = arith.constant dense<0.000000e+00> : vector<8x128xf32>
    %70 = tpu.matmul %68, %69, %cst_35 {dimension_numbers = #tpu.dot_dimension_numbers<[1], [0], [0], [1], [0, 0, 1, 1], [], []>} : vector<8x128xbf16>, vector<128x128xbf16>, vector<8x128xf32> -> vector<8x128xf32>
    %71 = vector.broadcast %1 : vector<1x128xf32> to vector<8x128xf32>
    %72 = arith.addf %70, %71 : vector<8x128xf32>
    %73 = arith.addf %67, %72 : vector<8x128xf32>
    %74 = arith.negf %73 : vector<8x128xf32>
    %75 = math.exp %74 : vector<8x128xf32>
    %cst_36 = arith.constant 1.000000e+00 : f32
    %76 = vector.broadcast %cst_36 : f32 to vector<8x128xf32>
    %77 = arith.addf %76, %75 : vector<8x128xf32>
    %78 = arith.divf %76, %77 : vector<8x128xf32>
    %c32_i32_37 = arith.constant 32 : i32
    %79 = tpu.dynamic_rotate %78 by %c32_i32_37 dim 1 : vector<8x128xf32>, i32 -> vector<8x128xf32>
    %80 = arith.mulf %79, %72 : vector<8x128xf32>
    %81 = arith.addf %67, %80 : vector<8x128xf32>
    %82 = math.tanh %81 : vector<8x128xf32>
    %c32_i32_38 = arith.constant 32 : i32
    %83 = tpu.dynamic_rotate %82 by %c32_i32_38 dim 1 : vector<8x128xf32>, i32 -> vector<8x128xf32>
    %84 = arith.subf %59, %83 : vector<8x128xf32>
    %85 = arith.mulf %78, %84 : vector<8x128xf32>
    %86 = arith.addf %83, %85 : vector<8x128xf32>
    %87 = arith.truncf %86 : vector<8x128xf32> to vector<8x128xbf16>
    %88 = arith.index_cast %c2_i32 : i32 to index
    %c0_39 = arith.constant 0 : index
    %c0_40 = arith.constant 0 : index
    %89 = vector.load %arg13[%88, %c0_39, %c0_40] : memref<8x8x128xbf16, #tpu.memory_space<vmem>>, vector<1x8x128xbf16>
    %90 = vector.shape_cast %89 : vector<1x8x128xbf16> to vector<8x128xbf16>
    %91 = vector.shape_cast %87 : vector<8x128xbf16> to vector<1x8x128xbf16>
    tpu.vector_store %arg13[%88, %c0_39, %c0_40], %91 {strides = array<i32>} : memref<8x8x128xbf16, #tpu.memory_space<vmem>>, vector<1x8x128xbf16>,
    %c3_i32 = arith.constant 3 : i32
    %92 = arith.index_cast %c3_i32 : i32 to index
    %c0_41 = arith.constant 0 : index
    %c0_42 = arith.constant 0 : index
    %93 = vector.load %arg12[%92, %c0_41, %c0_42] : memref<8x8x128xf32, #tpu.memory_space<vmem>>, vector<1x8x128xf32>
    %94 = vector.shape_cast %93 : vector<1x8x128xf32> to vector<8x128xf32>
    %95 = arith.truncf %86 : vector<8x128xf32> to vector<8x128xbf16>
    %c0_43 = arith.constant 0 : index
    %c0_44 = arith.constant 0 : index
    %96 = vector.load %arg2[%c0_43, %c0_44] : memref<128x128xbf16, #tpu.memory_space<vmem>>, vector<128x128xbf16>
    %cst_45 = arith.constant dense<0.000000e+00> : vector<8x128xf32>
    %97 = tpu.matmul %95, %96, %cst_45 {dimension_numbers = #tpu.dot_dimension_numbers<[1], [0], [0], [1], [0, 0, 1, 1], [], []>} : vector<8x128xbf16>, vector<128x128xbf16>, vector<8x128xf32> -> vector<8x128xf32>
    %98 = vector.broadcast %1 : vector<1x128xf32> to vector<8x128xf32>
    %99 = arith.addf %97, %98 : vector<8x128xf32>
    %100 = arith.addf %94, %99 : vector<8x128xf32>
    %101 = arith.negf %100 : vector<8x128xf32>
    %102 = math.exp %101 : vector<8x128xf32>
    %cst_46 = arith.constant 1.000000e+00 : f32
    %103 = vector.broadcast %cst_46 : f32 to vector<8x128xf32>
    %104 = arith.addf %103, %102 : vector<8x128xf32>
    %105 = arith.divf %103, %104 : vector<8x128xf32>
    %c32_i32_47 = arith.constant 32 : i32
    %106 = tpu.dynamic_rotate %105 by %c32_i32_47 dim 1 : vector<8x128xf32>, i32 -> vector<8x128xf32>
    %107 = arith.mulf %106, %99 : vector<8x128xf32>
    %108 = arith.addf %94, %107 : vector<8x128xf32>
    %109 = math.tanh %108 : vector<8x128xf32>
    %c32_i32_48 = arith.constant 32 : i32
    %110 = tpu.dynamic_rotate %109 by %c32_i32_48 dim 1 : vector<8x128xf32>, i32 -> vector<8x128xf32>
    %111 = arith.subf %86, %110 : vector<8x128xf32>
    %112 = arith.mulf %105, %111 : vector<8x128xf32>
    %113 = arith.addf %110, %112 : vector<8x128xf32>
    %114 = arith.truncf %113 : vector<8x128xf32> to vector<8x128xbf16>
    %115 = arith.index_cast %c3_i32 : i32 to index
    %c0_49 = arith.constant 0 : index
    %c0_50 = arith.constant 0 : index
    %116 = vector.load %arg13[%115, %c0_49, %c0_50] : memref<8x8x128xbf16, #tpu.memory_space<vmem>>, vector<1x8x128xbf16>
    %117 = vector.shape_cast %116 : vector<1x8x128xbf16> to vector<8x128xbf16>
    %118 = vector.shape_cast %114 : vector<8x128xbf16> to vector<1x8x128xbf16>
    tpu.vector_store %arg13[%115, %c0_49, %c0_50], %118 {strides = array<i32>} : memref<8x8x128xbf16, #tpu.memory_space<vmem>>, vector<1x8x128xbf16>,
    %c4_i32 = arith.constant 4 : i32
    %119 = arith.index_cast %c4_i32 : i32 to index
    %c0_51 = arith.constant 0 : index
    %c0_52 = arith.constant 0 : index
    %120 = vector.load %arg12[%119, %c0_51, %c0_52] : memref<8x8x128xf32, #tpu.memory_space<vmem>>, vector<1x8x128xf32>
    %121 = vector.shape_cast %120 : vector<1x8x128xf32> to vector<8x128xf32>
    %122 = arith.truncf %113 : vector<8x128xf32> to vector<8x128xbf16>
    %c0_53 = arith.constant 0 : index
    %c0_54 = arith.constant 0 : index
    %123 = vector.load %arg2[%c0_53, %c0_54] : memref<128x128xbf16, #tpu.memory_space<vmem>>, vector<128x128xbf16>
    %cst_55 = arith.constant dense<0.000000e+00> : vector<8x128xf32>
    %124 = tpu.matmul %122, %123, %cst_55 {dimension_numbers = #tpu.dot_dimension_numbers<[1], [0], [0], [1], [0, 0, 1, 1], [], []>} : vector<8x128xbf16>, vector<128x128xbf16>, vector<8x128xf32> -> vector<8x128xf32>
    %125 = vector.broadcast %1 : vector<1x128xf32> to vector<8x128xf32>
    %126 = arith.addf %124, %125 : vector<8x128xf32>
    %127 = arith.addf %121, %126 : vector<8x128xf32>
    %128 = arith.negf %127 : vector<8x128xf32>
    %129 = math.exp %128 : vector<8x128xf32>
    %cst_56 = arith.constant 1.000000e+00 : f32
    %130 = vector.broadcast %cst_56 : f32 to vector<8x128xf32>
    %131 = arith.addf %130, %129 : vector<8x128xf32>
    %132 = arith.divf %130, %131 : vector<8x128xf32>
    %c32_i32_57 = arith.constant 32 : i32
    %133 = tpu.dynamic_rotate %132 by %c32_i32_57 dim 1 : vector<8x128xf32>, i32 -> vector<8x128xf32>
    %134 = arith.mulf %133, %126 : vector<8x128xf32>
    %135 = arith.addf %121, %134 : vector<8x128xf32>
    %136 = math.tanh %135 : vector<8x128xf32>
    %c32_i32_58 = arith.constant 32 : i32
    %137 = tpu.dynamic_rotate %136 by %c32_i32_58 dim 1 : vector<8x128xf32>, i32 -> vector<8x128xf32>
    %138 = arith.subf %113, %137 : vector<8x128xf32>
    %139 = arith.mulf %132, %138 : vector<8x128xf32>
    %140 = arith.addf %137, %139 : vector<8x128xf32>
    %141 = arith.truncf %140 : vector<8x128xf32> to vector<8x128xbf16>
    %142 = arith.index_cast %c4_i32 : i32 to index
    %c0_59 = arith.constant 0 : index
    %c0_60 = arith.constant 0 : index
    %143 = vector.load %arg13[%142, %c0_59, %c0_60] : memref<8x8x128xbf16, #tpu.memory_space<vmem>>, vector<1x8x128xbf16>
    %144 = vector.shape_cast %143 : vector<1x8x128xbf16> to vector<8x128xbf16>
    %145 = vector.shape_cast %141 : vector<8x128xbf16> to vector<1x8x128xbf16>
    tpu.vector_store %arg13[%142, %c0_59, %c0_60], %145 {strides = array<i32>} : memref<8x8x128xbf16, #tpu.memory_space<vmem>>, vector<1x8x128xbf16>,
    %c5_i32 = arith.constant 5 : i32
    %146 = arith.index_cast %c5_i32 : i32 to index
    %c0_61 = arith.constant 0 : index
    %c0_62 = arith.constant 0 : index
    %147 = vector.load %arg12[%146, %c0_61, %c0_62] : memref<8x8x128xf32, #tpu.memory_space<vmem>>, vector<1x8x128xf32>
    %148 = vector.shape_cast %147 : vector<1x8x128xf32> to vector<8x128xf32>
    %149 = arith.truncf %140 : vector<8x128xf32> to vector<8x128xbf16>
    %c0_63 = arith.constant 0 : index
    %c0_64 = arith.constant 0 : index
    %150 = vector.load %arg2[%c0_63, %c0_64] : memref<128x128xbf16, #tpu.memory_space<vmem>>, vector<128x128xbf16>
    %cst_65 = arith.constant dense<0.000000e+00> : vector<8x128xf32>
    %151 = tpu.matmul %149, %150, %cst_65 {dimension_numbers = #tpu.dot_dimension_numbers<[1], [0], [0], [1], [0, 0, 1, 1], [], []>} : vector<8x128xbf16>, vector<128x128xbf16>, vector<8x128xf32> -> vector<8x128xf32>
    %152 = vector.broadcast %1 : vector<1x128xf32> to vector<8x128xf32>
    %153 = arith.addf %151, %152 : vector<8x128xf32>
    %154 = arith.addf %148, %153 : vector<8x128xf32>
    %155 = arith.negf %154 : vector<8x128xf32>
    %156 = math.exp %155 : vector<8x128xf32>
    %cst_66 = arith.constant 1.000000e+00 : f32
    %157 = vector.broadcast %cst_66 : f32 to vector<8x128xf32>
    %158 = arith.addf %157, %156 : vector<8x128xf32>
    %159 = arith.divf %157, %158 : vector<8x128xf32>
    %c32_i32_67 = arith.constant 32 : i32
    %160 = tpu.dynamic_rotate %159 by %c32_i32_67 dim 1 : vector<8x128xf32>, i32 -> vector<8x128xf32>
    %161 = arith.mulf %160, %153 : vector<8x128xf32>
    %162 = arith.addf %148, %161 : vector<8x128xf32>
    %163 = math.tanh %162 : vector<8x128xf32>
    %c32_i32_68 = arith.constant 32 : i32
    %164 = tpu.dynamic_rotate %163 by %c32_i32_68 dim 1 : vector<8x128xf32>, i32 -> vector<8x128xf32>
    %165 = arith.subf %140, %164 : vector<8x128xf32>
    %166 = arith.mulf %159, %165 : vector<8x128xf32>
    %167 = arith.addf %164, %166 : vector<8x128xf32>
    %168 = arith.truncf %167 : vector<8x128xf32> to vector<8x128xbf16>
    %169 = arith.index_cast %c5_i32 : i32 to index
    %c0_69 = arith.constant 0 : index
    %c0_70 = arith.constant 0 : index
    %170 = vector.load %arg13[%169, %c0_69, %c0_70] : memref<8x8x128xbf16, #tpu.memory_space<vmem>>, vector<1x8x128xbf16>
    %171 = vector.shape_cast %170 : vector<1x8x128xbf16> to vector<8x128xbf16>
    %172 = vector.shape_cast %168 : vector<8x128xbf16> to vector<1x8x128xbf16>
    tpu.vector_store %arg13[%169, %c0_69, %c0_70], %172 {strides = array<i32>} : memref<8x8x128xbf16, #tpu.memory_space<vmem>>, vector<1x8x128xbf16>,
    %c6_i32 = arith.constant 6 : i32
    %173 = arith.index_cast %c6_i32 : i32 to index
    %c0_71 = arith.constant 0 : index
    %c0_72 = arith.constant 0 : index
    %174 = vector.load %arg12[%173, %c0_71, %c0_72] : memref<8x8x128xf32, #tpu.memory_space<vmem>>, vector<1x8x128xf32>
    %175 = vector.shape_cast %174 : vector<1x8x128xf32> to vector<8x128xf32>
    %176 = arith.truncf %167 : vector<8x128xf32> to vector<8x128xbf16>
    %c0_73 = arith.constant 0 : index
    %c0_74 = arith.constant 0 : index
    %177 = vector.load %arg2[%c0_73, %c0_74] : memref<128x128xbf16, #tpu.memory_space<vmem>>, vector<128x128xbf16>
    %cst_75 = arith.constant dense<0.000000e+00> : vector<8x128xf32>
    %178 = tpu.matmul %176, %177, %cst_75 {dimension_numbers = #tpu.dot_dimension_numbers<[1], [0], [0], [1], [0, 0, 1, 1], [], []>} : vector<8x128xbf16>, vector<128x128xbf16>, vector<8x128xf32> -> vector<8x128xf32>
    %179 = vector.broadcast %1 : vector<1x128xf32> to vector<8x128xf32>
    %180 = arith.addf %178, %179 : vector<8x128xf32>
    %181 = arith.addf %175, %180 : vector<8x128xf32>
    %182 = arith.negf %181 : vector<8x128xf32>
    %183 = math.exp %182 : vector<8x128xf32>
    %cst_76 = arith.constant 1.000000e+00 : f32
    %184 = vector.broadcast %cst_76 : f32 to vector<8x128xf32>
    %185 = arith.addf %184, %183 : vector<8x128xf32>
    %186 = arith.divf %184, %185 : vector<8x128xf32>
    %c32_i32_77 = arith.constant 32 : i32
    %187 = tpu.dynamic_rotate %186 by %c32_i32_77 dim 1 : vector<8x128xf32>, i32 -> vector<8x128xf32>
    %188 = arith.mulf %187, %180 : vector<8x128xf32>
    %189 = arith.addf %175, %188 : vector<8x128xf32>
    %190 = math.tanh %189 : vector<8x128xf32>
    %c32_i32_78 = arith.constant 32 : i32
    %191 = tpu.dynamic_rotate %190 by %c32_i32_78 dim 1 : vector<8x128xf32>, i32 -> vector<8x128xf32>
    %192 = arith.subf %167, %191 : vector<8x128xf32>
    %193 = arith.mulf %186, %192 : vector<8x128xf32>
    %194 = arith.addf %191, %193 : vector<8x128xf32>
    %195 = arith.truncf %194 : vector<8x128xf32> to vector<8x128xbf16>
    %196 = arith.index_cast %c6_i32 : i32 to index
    %c0_79 = arith.constant 0 : index
    %c0_80 = arith.constant 0 : index
    %197 = vector.load %arg13[%196, %c0_79, %c0_80] : memref<8x8x128xbf16, #tpu.memory_space<vmem>>, vector<1x8x128xbf16>
    %198 = vector.shape_cast %197 : vector<1x8x128xbf16> to vector<8x128xbf16>
    %199 = vector.shape_cast %195 : vector<8x128xbf16> to vector<1x8x128xbf16>
    tpu.vector_store %arg13[%196, %c0_79, %c0_80], %199 {strides = array<i32>} : memref<8x8x128xbf16, #tpu.memory_space<vmem>>, vector<1x8x128xbf16>,
    %c7_i32 = arith.constant 7 : i32
    %200 = arith.index_cast %c7_i32 : i32 to index
    %c0_81 = arith.constant 0 : index
    %c0_82 = arith.constant 0 : index
    %201 = vector.load %arg12[%200, %c0_81, %c0_82] : memref<8x8x128xf32, #tpu.memory_space<vmem>>, vector<1x8x128xf32>
    %202 = vector.shape_cast %201 : vector<1x8x128xf32> to vector<8x128xf32>
    %203 = arith.truncf %194 : vector<8x128xf32> to vector<8x128xbf16>
    %c0_83 = arith.constant 0 : index
    %c0_84 = arith.constant 0 : index
    %204 = vector.load %arg2[%c0_83, %c0_84] : memref<128x128xbf16, #tpu.memory_space<vmem>>, vector<128x128xbf16>
    %cst_85 = arith.constant dense<0.000000e+00> : vector<8x128xf32>
    %205 = tpu.matmul %203, %204, %cst_85 {dimension_numbers = #tpu.dot_dimension_numbers<[1], [0], [0], [1], [0, 0, 1, 1], [], []>} : vector<8x128xbf16>, vector<128x128xbf16>, vector<8x128xf32> -> vector<8x128xf32>
    %206 = vector.broadcast %1 : vector<1x128xf32> to vector<8x128xf32>
    %207 = arith.addf %205, %206 : vector<8x128xf32>
    %208 = arith.addf %202, %207 : vector<8x128xf32>
    %209 = arith.negf %208 : vector<8x128xf32>
    %210 = math.exp %209 : vector<8x128xf32>
    %cst_86 = arith.constant 1.000000e+00 : f32
    %211 = vector.broadcast %cst_86 : f32 to vector<8x128xf32>
    %212 = arith.addf %211, %210 : vector<8x128xf32>
    %213 = arith.divf %211, %212 : vector<8x128xf32>
    %c32_i32_87 = arith.constant 32 : i32
    %214 = tpu.dynamic_rotate %213 by %c32_i32_87 dim 1 : vector<8x128xf32>, i32 -> vector<8x128xf32>
    %215 = arith.mulf %214, %207 : vector<8x128xf32>
    %216 = arith.addf %202, %215 : vector<8x128xf32>
    %217 = math.tanh %216 : vector<8x128xf32>
    %c32_i32_88 = arith.constant 32 : i32
    %218 = tpu.dynamic_rotate %217 by %c32_i32_88 dim 1 : vector<8x128xf32>, i32 -> vector<8x128xf32>
    %219 = arith.subf %194, %218 : vector<8x128xf32>
    %220 = arith.mulf %213, %219 : vector<8x128xf32>
    %221 = arith.addf %218, %220 : vector<8x128xf32>
    %222 = arith.truncf %221 : vector<8x128xf32> to vector<8x128xbf16>
    %223 = arith.index_cast %c7_i32 : i32 to index
    %c0_89 = arith.constant 0 : index
    %c0_90 = arith.constant 0 : index
    %224 = vector.load %arg13[%223, %c0_89, %c0_90] : memref<8x8x128xbf16, #tpu.memory_space<vmem>>, vector<1x8x128xbf16>
    %225 = vector.shape_cast %224 : vector<1x8x128xbf16> to vector<8x128xbf16>
    %226 = vector.shape_cast %222 : vector<8x128xbf16> to vector<1x8x128xbf16>
    tpu.vector_store %arg13[%223, %c0_89, %c0_90], %226 {strides = array<i32>} : memref<8x8x128xbf16, #tpu.memory_space<vmem>>, vector<1x8x128xbf16>,
    %c8_i32 = arith.constant 8 : i32
    %c0_91 = arith.constant 0 : index
    %c0_92 = arith.constant 0 : index
    %227 = vector.load %arg7[%c0_91, %c0_92] : memref<1x128xf32, #tpu.memory_space<vmem>>, vector<1x128xf32>
    %c0_93 = arith.constant 0 : index
    %c0_94 = arith.constant 0 : index
    %228 = vector.load %arg8[%c0_93, %c0_94] : memref<1x128xf32, #tpu.memory_space<vmem>>, vector<1x128xf32>
    %c0_95 = arith.constant 0 : index
    %c0_96 = arith.constant 0 : index
    %c0_97 = arith.constant 0 : index
    %229 = vector.load %arg13[%c0_95, %c0_96, %c0_97] : memref<8x8x128xbf16, #tpu.memory_space<vmem>>, vector<8x8x128xbf16>
    %230 = vector.shape_cast %229 : vector<8x8x128xbf16> to vector<64x128xbf16>
    %c0_98 = arith.constant 0 : index
    %c0_99 = arith.constant 0 : index
    %231 = vector.load %arg5[%c0_98, %c0_99] : memref<128x128xbf16, #tpu.memory_space<vmem>>, vector<128x128xbf16>
    %cst_100 = arith.constant dense<0.000000e+00> : vector<64x128xf32>
    %232 = tpu.matmul %230, %231, %cst_100 {dimension_numbers = #tpu.dot_dimension_numbers<[1], [0], [0], [1], [0, 0, 1, 1], [], []>} : vector<64x128xbf16>, vector<128x128xbf16>, vector<64x128xf32> -> vector<64x128xf32>
    %233 = vector.broadcast %227 : vector<1x128xf32> to vector<64x128xf32>
    %234 = arith.addf %232, %233 : vector<64x128xf32>
    %235 = vector.shape_cast %234 : vector<64x128xf32> to vector<8x8x128xf32>
    %c0_101 = arith.constant 0 : index
    %c0_102 = arith.constant 0 : index
    %c0_103 = arith.constant 0 : index
    %236 = vector.load %arg12[%c0_101, %c0_102, %c0_103] : memref<8x8x128xf32, #tpu.memory_space<vmem>>, vector<8x8x128xf32>
    tpu.vector_store %arg12[%c0_101, %c0_102, %c0_103], %235 {strides = array<i32>} : memref<8x8x128xf32, #tpu.memory_space<vmem>>, vector<8x8x128xf32>,
    %cst_104 = arith.constant 0.000000e+00 : f32
    %237 = vector.broadcast %cst_104 : f32 to vector<8x128xf32>
    %c0_i32_105 = arith.constant 0 : i32
    %238 = arith.index_cast %c0_i32_105 : i32 to index
    %c0_106 = arith.constant 0 : index
    %c0_107 = arith.constant 0 : index
    %239 = vector.load %arg12[%238, %c0_106, %c0_107] : memref<8x8x128xf32, #tpu.memory_space<vmem>>, vector<1x8x128xf32>
    %240 = vector.shape_cast %239 : vector<1x8x128xf32> to vector<8x128xf32>
    %241 = arith.truncf %237 : vector<8x128xf32> to vector<8x128xbf16>
    %c0_108 = arith.constant 0 : index
    %c0_109 = arith.constant 0 : index
    %242 = vector.load %arg6[%c0_108, %c0_109] : memref<128x128xbf16, #tpu.memory_space<vmem>>, vector<128x128xbf16>
    %cst_110 = arith.constant dense<0.000000e+00> : vector<8x128xf32>
    %243 = tpu.matmul %241, %242, %cst_110 {dimension_numbers = #tpu.dot_dimension_numbers<[1], [0], [0], [1], [0, 0, 1, 1], [], []>} : vector<8x128xbf16>, vector<128x128xbf16>, vector<8x128xf32> -> vector<8x128xf32>
    %244 = vector.broadcast %228 : vector<1x128xf32> to vector<8x128xf32>
    %245 = arith.addf %243, %244 : vector<8x128xf32>
    %246 = arith.addf %240, %245 : vector<8x128xf32>
    %247 = arith.negf %246 : vector<8x128xf32>
    %248 = math.exp %247 : vector<8x128xf32>
    %cst_111 = arith.constant 1.000000e+00 : f32
    %249 = vector.broadcast %cst_111 : f32 to vector<8x128xf32>
    %250 = arith.addf %249, %248 : vector<8x128xf32>
    %251 = arith.divf %249, %250 : vector<8x128xf32>
    %c32_i32_112 = arith.constant 32 : i32
    %252 = tpu.dynamic_rotate %251 by %c32_i32_112 dim 1 : vector<8x128xf32>, i32 -> vector<8x128xf32>
    %253 = arith.mulf %252, %245 : vector<8x128xf32>
    %254 = arith.addf %240, %253 : vector<8x128xf32>
    %255 = math.tanh %254 : vector<8x128xf32>
    %c32_i32_113 = arith.constant 32 : i32
    %256 = tpu.dynamic_rotate %255 by %c32_i32_113 dim 1 : vector<8x128xf32>, i32 -> vector<8x128xf32>
    %257 = arith.subf %237, %256 : vector<8x128xf32>
    %258 = arith.mulf %251, %257 : vector<8x128xf32>
    %259 = arith.addf %256, %258 : vector<8x128xf32>
    %c1_i32_114 = arith.constant 1 : i32
    %260 = arith.index_cast %c1_i32_114 : i32 to index
    %c0_115 = arith.constant 0 : index
    %c0_116 = arith.constant 0 : index
    %261 = vector.load %arg12[%260, %c0_115, %c0_116] : memref<8x8x128xf32, #tpu.memory_space<vmem>>, vector<1x8x128xf32>
    %262 = vector.shape_cast %261 : vector<1x8x128xf32> to vector<8x128xf32>
    %263 = arith.truncf %259 : vector<8x128xf32> to vector<8x128xbf16>
    %c0_117 = arith.constant 0 : index
    %c0_118 = arith.constant 0 : index
    %264 = vector.load %arg6[%c0_117, %c0_118] : memref<128x128xbf16, #tpu.memory_space<vmem>>, vector<128x128xbf16>
    %cst_119 = arith.constant dense<0.000000e+00> : vector<8x128xf32>
    %265 = tpu.matmul %263, %264, %cst_119 {dimension_numbers = #tpu.dot_dimension_numbers<[1], [0], [0], [1], [0, 0, 1, 1], [], []>} : vector<8x128xbf16>, vector<128x128xbf16>, vector<8x128xf32> -> vector<8x128xf32>
    %266 = vector.broadcast %228 : vector<1x128xf32> to vector<8x128xf32>
    %267 = arith.addf %265, %266 : vector<8x128xf32>
    %268 = arith.addf %262, %267 : vector<8x128xf32>
    %269 = arith.negf %268 : vector<8x128xf32>
    %270 = math.exp %269 : vector<8x128xf32>
    %cst_120 = arith.constant 1.000000e+00 : f32
    %271 = vector.broadcast %cst_120 : f32 to vector<8x128xf32>
    %272 = arith.addf %271, %270 : vector<8x128xf32>
    %273 = arith.divf %271, %272 : vector<8x128xf32>
    %c32_i32_121 = arith.constant 32 : i32
    %274 = tpu.dynamic_rotate %273 by %c32_i32_121 dim 1 : vector<8x128xf32>, i32 -> vector<8x128xf32>
    %275 = arith.mulf %274, %267 : vector<8x128xf32>
    %276 = arith.addf %262, %275 : vector<8x128xf32>
    %277 = math.tanh %276 : vector<8x128xf32>
    %c32_i32_122 = arith.constant 32 : i32
    %278 = tpu.dynamic_rotate %277 by %c32_i32_122 dim 1 : vector<8x128xf32>, i32 -> vector<8x128xf32>
    %279 = arith.subf %259, %278 : vector<8x128xf32>
    %280 = arith.mulf %273, %279 : vector<8x128xf32>
    %281 = arith.addf %278, %280 : vector<8x128xf32>
    %c2_i32_123 = arith.constant 2 : i32
    %282 = arith.index_cast %c2_i32_123 : i32 to index
    %c0_124 = arith.constant 0 : index
    %c0_125 = arith.constant 0 : index
    %283 = vector.load %arg12[%282, %c0_124, %c0_125] : memref<8x8x128xf32, #tpu.memory_space<vmem>>, vector<1x8x128xf32>
    %284 = vector.shape_cast %283 : vector<1x8x128xf32> to vector<8x128xf32>
    %285 = arith.truncf %281 : vector<8x128xf32> to vector<8x128xbf16>
    %c0_126 = arith.constant 0 : index
    %c0_127 = arith.constant 0 : index
    %286 = vector.load %arg6[%c0_126, %c0_127] : memref<128x128xbf16, #tpu.memory_space<vmem>>, vector<128x128xbf16>
    %cst_128 = arith.constant dense<0.000000e+00> : vector<8x128xf32>
    %287 = tpu.matmul %285, %286, %cst_128 {dimension_numbers = #tpu.dot_dimension_numbers<[1], [0], [0], [1], [0, 0, 1, 1], [], []>} : vector<8x128xbf16>, vector<128x128xbf16>, vector<8x128xf32> -> vector<8x128xf32>
    %288 = vector.broadcast %228 : vector<1x128xf32> to vector<8x128xf32>
    %289 = arith.addf %287, %288 : vector<8x128xf32>
    %290 = arith.addf %284, %289 : vector<8x128xf32>
    %291 = arith.negf %290 : vector<8x128xf32>
    %292 = math.exp %291 : vector<8x128xf32>
    %cst_129 = arith.constant 1.000000e+00 : f32
    %293 = vector.broadcast %cst_129 : f32 to vector<8x128xf32>
    %294 = arith.addf %293, %292 : vector<8x128xf32>
    %295 = arith.divf %293, %294 : vector<8x128xf32>
    %c32_i32_130 = arith.constant 32 : i32
    %296 = tpu.dynamic_rotate %295 by %c32_i32_130 dim 1 : vector<8x128xf32>, i32 -> vector<8x128xf32>
    %297 = arith.mulf %296, %289 : vector<8x128xf32>
    %298 = arith.addf %284, %297 : vector<8x128xf32>
    %299 = math.tanh %298 : vector<8x128xf32>
    %c32_i32_131 = arith.constant 32 : i32
    %300 = tpu.dynamic_rotate %299 by %c32_i32_131 dim 1 : vector<8x128xf32>, i32 -> vector<8x128xf32>
    %301 = arith.subf %281, %300 : vector<8x128xf32>
    %302 = arith.mulf %295, %301 : vector<8x128xf32>
    %303 = arith.addf %300, %302 : vector<8x128xf32>
    %c3_i32_132 = arith.constant 3 : i32
    %304 = arith.index_cast %c3_i32_132 : i32 to index
    %c0_133 = arith.constant 0 : index
    %c0_134 = arith.constant 0 : index
    %305 = vector.load %arg12[%304, %c0_133, %c0_134] : memref<8x8x128xf32, #tpu.memory_space<vmem>>, vector<1x8x128xf32>
    %306 = vector.shape_cast %305 : vector<1x8x128xf32> to vector<8x128xf32>
    %307 = arith.truncf %303 : vector<8x128xf32> to vector<8x128xbf16>
    %c0_135 = arith.constant 0 : index
    %c0_136 = arith.constant 0 : index
    %308 = vector.load %arg6[%c0_135, %c0_136] : memref<128x128xbf16, #tpu.memory_space<vmem>>, vector<128x128xbf16>
    %cst_137 = arith.constant dense<0.000000e+00> : vector<8x128xf32>
    %309 = tpu.matmul %307, %308, %cst_137 {dimension_numbers = #tpu.dot_dimension_numbers<[1], [0], [0], [1], [0, 0, 1, 1], [], []>} : vector<8x128xbf16>, vector<128x128xbf16>, vector<8x128xf32> -> vector<8x128xf32>
    %310 = vector.broadcast %228 : vector<1x128xf32> to vector<8x128xf32>
    %311 = arith.addf %309, %310 : vector<8x128xf32>
    %312 = arith.addf %306, %311 : vector<8x128xf32>
    %313 = arith.negf %312 : vector<8x128xf32>
    %314 = math.exp %313 : vector<8x128xf32>
    %cst_138 = arith.constant 1.000000e+00 : f32
    %315 = vector.broadcast %cst_138 : f32 to vector<8x128xf32>
    %316 = arith.addf %315, %314 : vector<8x128xf32>
    %317 = arith.divf %315, %316 : vector<8x128xf32>
    %c32_i32_139 = arith.constant 32 : i32
    %318 = tpu.dynamic_rotate %317 by %c32_i32_139 dim 1 : vector<8x128xf32>, i32 -> vector<8x128xf32>
    %319 = arith.mulf %318, %311 : vector<8x128xf32>
    %320 = arith.addf %306, %319 : vector<8x128xf32>
    %321 = math.tanh %320 : vector<8x128xf32>
    %c32_i32_140 = arith.constant 32 : i32
    %322 = tpu.dynamic_rotate %321 by %c32_i32_140 dim 1 : vector<8x128xf32>, i32 -> vector<8x128xf32>
    %323 = arith.subf %303, %322 : vector<8x128xf32>
    %324 = arith.mulf %317, %323 : vector<8x128xf32>
    %325 = arith.addf %322, %324 : vector<8x128xf32>
    %c4_i32_141 = arith.constant 4 : i32
    %326 = arith.index_cast %c4_i32_141 : i32 to index
    %c0_142 = arith.constant 0 : index
    %c0_143 = arith.constant 0 : index
    %327 = vector.load %arg12[%326, %c0_142, %c0_143] : memref<8x8x128xf32, #tpu.memory_space<vmem>>, vector<1x8x128xf32>
    %328 = vector.shape_cast %327 : vector<1x8x128xf32> to vector<8x128xf32>
    %329 = arith.truncf %325 : vector<8x128xf32> to vector<8x128xbf16>
    %c0_144 = arith.constant 0 : index
    %c0_145 = arith.constant 0 : index
    %330 = vector.load %arg6[%c0_144, %c0_145] : memref<128x128xbf16, #tpu.memory_space<vmem>>, vector<128x128xbf16>
    %cst_146 = arith.constant dense<0.000000e+00> : vector<8x128xf32>
    %331 = tpu.matmul %329, %330, %cst_146 {dimension_numbers = #tpu.dot_dimension_numbers<[1], [0], [0], [1], [0, 0, 1, 1], [], []>} : vector<8x128xbf16>, vector<128x128xbf16>, vector<8x128xf32> -> vector<8x128xf32>
    %332 = vector.broadcast %228 : vector<1x128xf32> to vector<8x128xf32>
    %333 = arith.addf %331, %332 : vector<8x128xf32>
    %334 = arith.addf %328, %333 : vector<8x128xf32>
    %335 = arith.negf %334 : vector<8x128xf32>
    %336 = math.exp %335 : vector<8x128xf32>
    %cst_147 = arith.constant 1.000000e+00 : f32
    %337 = vector.broadcast %cst_147 : f32 to vector<8x128xf32>
    %338 = arith.addf %337, %336 : vector<8x128xf32>
    %339 = arith.divf %337, %338 : vector<8x128xf32>
    %c32_i32_148 = arith.constant 32 : i32
    %340 = tpu.dynamic_rotate %339 by %c32_i32_148 dim 1 : vector<8x128xf32>, i32 -> vector<8x128xf32>
    %341 = arith.mulf %340, %333 : vector<8x128xf32>
    %342 = arith.addf %328, %341 : vector<8x128xf32>
    %343 = math.tanh %342 : vector<8x128xf32>
    %c32_i32_149 = arith.constant 32 : i32
    %344 = tpu.dynamic_rotate %343 by %c32_i32_149 dim 1 : vector<8x128xf32>, i32 -> vector<8x128xf32>
    %345 = arith.subf %325, %344 : vector<8x128xf32>
    %346 = arith.mulf %339, %345 : vector<8x128xf32>
    %347 = arith.addf %344, %346 : vector<8x128xf32>
    %c5_i32_150 = arith.constant 5 : i32
    %348 = arith.index_cast %c5_i32_150 : i32 to index
    %c0_151 = arith.constant 0 : index
    %c0_152 = arith.constant 0 : index
    %349 = vector.load %arg12[%348, %c0_151, %c0_152] : memref<8x8x128xf32, #tpu.memory_space<vmem>>, vector<1x8x128xf32>
    %350 = vector.shape_cast %349 : vector<1x8x128xf32> to vector<8x128xf32>
    %351 = arith.truncf %347 : vector<8x128xf32> to vector<8x128xbf16>
    %c0_153 = arith.constant 0 : index
    %c0_154 = arith.constant 0 : index
    %352 = vector.load %arg6[%c0_153, %c0_154] : memref<128x128xbf16, #tpu.memory_space<vmem>>, vector<128x128xbf16>
    %cst_155 = arith.constant dense<0.000000e+00> : vector<8x128xf32>
    %353 = tpu.matmul %351, %352, %cst_155 {dimension_numbers = #tpu.dot_dimension_numbers<[1], [0], [0], [1], [0, 0, 1, 1], [], []>} : vector<8x128xbf16>, vector<128x128xbf16>, vector<8x128xf32> -> vector<8x128xf32>
    %354 = vector.broadcast %228 : vector<1x128xf32> to vector<8x128xf32>
    %355 = arith.addf %353, %354 : vector<8x128xf32>
    %356 = arith.addf %350, %355 : vector<8x128xf32>
    %357 = arith.negf %356 : vector<8x128xf32>
    %358 = math.exp %357 : vector<8x128xf32>
    %cst_156 = arith.constant 1.000000e+00 : f32
    %359 = vector.broadcast %cst_156 : f32 to vector<8x128xf32>
    %360 = arith.addf %359, %358 : vector<8x128xf32>
    %361 = arith.divf %359, %360 : vector<8x128xf32>
    %c32_i32_157 = arith.constant 32 : i32
    %362 = tpu.dynamic_rotate %361 by %c32_i32_157 dim 1 : vector<8x128xf32>, i32 -> vector<8x128xf32>
    %363 = arith.mulf %362, %355 : vector<8x128xf32>
    %364 = arith.addf %350, %363 : vector<8x128xf32>
    %365 = math.tanh %364 : vector<8x128xf32>
    %c32_i32_158 = arith.constant 32 : i32
    %366 = tpu.dynamic_rotate %365 by %c32_i32_158 dim 1 : vector<8x128xf32>, i32 -> vector<8x128xf32>
    %367 = arith.subf %347, %366 : vector<8x128xf32>
    %368 = arith.mulf %361, %367 : vector<8x128xf32>
    %369 = arith.addf %366, %368 : vector<8x128xf32>
    %c6_i32_159 = arith.constant 6 : i32
    %370 = arith.index_cast %c6_i32_159 : i32 to index
    %c0_160 = arith.constant 0 : index
    %c0_161 = arith.constant 0 : index
    %371 = vector.load %arg12[%370, %c0_160, %c0_161] : memref<8x8x128xf32, #tpu.memory_space<vmem>>, vector<1x8x128xf32>
    %372 = vector.shape_cast %371 : vector<1x8x128xf32> to vector<8x128xf32>
    %373 = arith.truncf %369 : vector<8x128xf32> to vector<8x128xbf16>
    %c0_162 = arith.constant 0 : index
    %c0_163 = arith.constant 0 : index
    %374 = vector.load %arg6[%c0_162, %c0_163] : memref<128x128xbf16, #tpu.memory_space<vmem>>, vector<128x128xbf16>
    %cst_164 = arith.constant dense<0.000000e+00> : vector<8x128xf32>
    %375 = tpu.matmul %373, %374, %cst_164 {dimension_numbers = #tpu.dot_dimension_numbers<[1], [0], [0], [1], [0, 0, 1, 1], [], []>} : vector<8x128xbf16>, vector<128x128xbf16>, vector<8x128xf32> -> vector<8x128xf32>
    %376 = vector.broadcast %228 : vector<1x128xf32> to vector<8x128xf32>
    %377 = arith.addf %375, %376 : vector<8x128xf32>
    %378 = arith.addf %372, %377 : vector<8x128xf32>
    %379 = arith.negf %378 : vector<8x128xf32>
    %380 = math.exp %379 : vector<8x128xf32>
    %cst_165 = arith.constant 1.000000e+00 : f32
    %381 = vector.broadcast %cst_165 : f32 to vector<8x128xf32>
    %382 = arith.addf %381, %380 : vector<8x128xf32>
    %383 = arith.divf %381, %382 : vector<8x128xf32>
    %c32_i32_166 = arith.constant 32 : i32
    %384 = tpu.dynamic_rotate %383 by %c32_i32_166 dim 1 : vector<8x128xf32>, i32 -> vector<8x128xf32>
    %385 = arith.mulf %384, %377 : vector<8x128xf32>
    %386 = arith.addf %372, %385 : vector<8x128xf32>
    %387 = math.tanh %386 : vector<8x128xf32>
    %c32_i32_167 = arith.constant 32 : i32
    %388 = tpu.dynamic_rotate %387 by %c32_i32_167 dim 1 : vector<8x128xf32>, i32 -> vector<8x128xf32>
    %389 = arith.subf %369, %388 : vector<8x128xf32>
    %390 = arith.mulf %383, %389 : vector<8x128xf32>
    %391 = arith.addf %388, %390 : vector<8x128xf32>
    %c7_i32_168 = arith.constant 7 : i32
    %392 = arith.index_cast %c7_i32_168 : i32 to index
    %c0_169 = arith.constant 0 : index
    %c0_170 = arith.constant 0 : index
    %393 = vector.load %arg12[%392, %c0_169, %c0_170] : memref<8x8x128xf32, #tpu.memory_space<vmem>>, vector<1x8x128xf32>
    %394 = vector.shape_cast %393 : vector<1x8x128xf32> to vector<8x128xf32>
    %395 = arith.truncf %391 : vector<8x128xf32> to vector<8x128xbf16>
    %c0_171 = arith.constant 0 : index
    %c0_172 = arith.constant 0 : index
    %396 = vector.load %arg6[%c0_171, %c0_172] : memref<128x128xbf16, #tpu.memory_space<vmem>>, vector<128x128xbf16>
    %cst_173 = arith.constant dense<0.000000e+00> : vector<8x128xf32>
    %397 = tpu.matmul %395, %396, %cst_173 {dimension_numbers = #tpu.dot_dimension_numbers<[1], [0], [0], [1], [0, 0, 1, 1], [], []>} : vector<8x128xbf16>, vector<128x128xbf16>, vector<8x128xf32> -> vector<8x128xf32>
    %398 = vector.broadcast %228 : vector<1x128xf32> to vector<8x128xf32>
    %399 = arith.addf %397, %398 : vector<8x128xf32>
    %400 = arith.addf %394, %399 : vector<8x128xf32>
    %401 = arith.negf %400 : vector<8x128xf32>
    %402 = math.exp %401 : vector<8x128xf32>
    %cst_174 = arith.constant 1.000000e+00 : f32
    %403 = vector.broadcast %cst_174 : f32 to vector<8x128xf32>
    %404 = arith.addf %403, %402 : vector<8x128xf32>
    %405 = arith.divf %403, %404 : vector<8x128xf32>
    %c32_i32_175 = arith.constant 32 : i32
    %406 = tpu.dynamic_rotate %405 by %c32_i32_175 dim 1 : vector<8x128xf32>, i32 -> vector<8x128xf32>
    %407 = arith.mulf %406, %399 : vector<8x128xf32>
    %408 = arith.addf %394, %407 : vector<8x128xf32>
    %409 = math.tanh %408 : vector<8x128xf32>
    %c32_i32_176 = arith.constant 32 : i32
    %410 = tpu.dynamic_rotate %409 by %c32_i32_176 dim 1 : vector<8x128xf32>, i32 -> vector<8x128xf32>
    %411 = arith.subf %391, %410 : vector<8x128xf32>
    %412 = arith.mulf %405, %411 : vector<8x128xf32>
    %413 = arith.addf %410, %412 : vector<8x128xf32>
    %c8_i32_177 = arith.constant 8 : i32
    %c0_178 = arith.constant 0 : index
    %c0_179 = arith.constant 0 : index
    %414 = vector.load %arg9[%c0_178, %c0_179] : memref<128x128xf32, #tpu.memory_space<vmem>>, vector<128x128xf32>
    %cst_180 = arith.constant dense<0.000000e+00> : vector<8x128xf32>
    %415 = tpu.matmul %413, %414, %cst_180 {dimension_numbers = #tpu.dot_dimension_numbers<[1], [0], [0], [1], [0, 0, 1, 1], [], []>} : vector<8x128xf32>, vector<128x128xf32>, vector<8x128xf32> -> vector<8x128xf32>
    %c0_181 = arith.constant 0 : index
    %c0_182 = arith.constant 0 : index
    %416 = vector.load %arg10[%c0_181, %c0_182] : memref<1x128xf32, #tpu.memory_space<vmem>>, vector<1x128xf32>
    %417 = vector.broadcast %416 : vector<1x128xf32> to vector<8x128xf32>
    %418 = arith.addf %415, %417 : vector<8x128xf32>
    %c0_183 = arith.constant 0 : index
    %c0_184 = arith.constant 0 : index
    %419 = vector.load %arg11[%c0_183, %c0_184] : memref<8x128xf32, #tpu.memory_space<vmem>>, vector<8x128xf32>
    tpu.vector_store %arg11[%c0_183, %c0_184], %418 {strides = array<i32>} : memref<8x128xf32, #tpu.memory_space<vmem>>, vector<8x128xf32>,
    return
  }
}

</mosaic_0001>

<llo_original>
// kernel: tpu_custom_call.1
$region0: #{tpu_custom_call.1}
  #allocation0 [shape = 'u32[]', space=smem, size = 0x4, offset = 0x4, fixed_abs, tag = 'smem constant byte address 0x4 - core index']
  #allocation1 [shape = 'u32[144,128]{1,0:T(1,128)}', space=vmem, size = 0x12000, scoped, tag = 'internal scratch']
  #allocation2 [shape = 'f32[8,8,128]{2,1,0:T(8,128)}', space=vmem, size = 0x8000, scoped, tag = 'scratch operand']
  #allocation3 [shape = 'bf16[8,8,128]{2,1,0:T(8,128)(2,1)}', space=vmem, size = 0x4000, scoped, tag = 'scratch operand']
  %s0 = inlined_call_operand.hbm [shape: bf16[8,8,128], index: 0, kind: input, shape index: {}]
  %s1 = inlined_call_operand.hbm [shape: bf16[128,128], index: 1, kind: input, shape index: {}]
  %s2 = inlined_call_operand.hbm [shape: bf16[128,128], index: 2, kind: input, shape index: {}]
  %s3 = inlined_call_operand.vmem [shape: f32[1,128], index: 3, kind: input, shape index: {}]
  %s4 = inlined_call_operand.vmem [shape: f32[1,128], index: 4, kind: input, shape index: {}]
  %s5 = inlined_call_operand.hbm [shape: bf16[128,128], index: 5, kind: input, shape index: {}]
  %s6 = inlined_call_operand.hbm [shape: bf16[128,128], index: 6, kind: input, shape index: {}]
  %s7 = inlined_call_operand.vmem [shape: f32[1,128], index: 7, kind: input, shape index: {}]
  %s8 = inlined_call_operand.vmem [shape: f32[1,128], index: 8, kind: input, shape index: {}]
  %s9 = inlined_call_operand.hbm [shape: f32[128,128], index: 9, kind: input, shape index: {}]
  %s10 = inlined_call_operand.vmem [shape: f32[1,128], index: 10, kind: input, shape index: {}]
  %s11 = inlined_call_operand.hbm [shape: f32[8,128], index: 11, kind: output, shape index: {}]
  %s12 = sld [smem:[#allocation0]]
  $region78: #{tpu_custom_call.1} parent=0
    _
  %s14 = ssub.s32 1, %s12
  %s15 = scalar_select 0, %s14, %s12
  $region1: #{tpu_custom_call.1} parent=0
    #allocation4 [shape = 'u8[16384]{0}', space=vmem, size = 0x4000, scoped, tag = 'input window, operand 0, single buffered']
    #allocation5 [shape = 's32[1]{0}', space=sflag, size = 0x4, scoped, tag = 'scoped memory for tpu_custom_call.1']
    #allocation6 [shape = 's32[1]{0}', space=sflag, size = 0x4, scoped, tag = 'scoped memory for tpu_custom_call.1']
    #allocation7 [shape = 'u8[32768]{0}', space=vmem, size = 0x8000, scoped, tag = 'input window, operand 1, single buffered']
    #allocation8 [shape = 's32[1]{0}', space=sflag, size = 0x4, scoped, tag = 'scoped memory for tpu_custom_call.1']
    #allocation9 [shape = 'u8[32768]{0}', space=vmem, size = 0x8000, scoped, tag = 'input window, operand 2, single buffered']
    #allocation10 [shape = 'u8[32768]{0}', space=vmem, size = 0x8000, scoped, tag = 'input window, operand 5, single buffered']
    #allocation11 [shape = 's32[1]{0}', space=sflag, size = 0x4, scoped, tag = 'scoped memory for tpu_custom_call.1']
    #allocation12 [shape = 'u8[32768]{0}', space=vmem, size = 0x8000, scoped, tag = 'input window, operand 6, single buffered']
    #allocation13 [shape = 'u8[65536]{0}', space=vmem, size = 0x10000, scoped, tag = 'input window, operand 9, single buffered']
    #allocation14 [shape = 's32[1]{0}', space=sflag, size = 0x4, scoped, tag = 'scoped memory for tpu_custom_call.1']
    #allocation15 [shape = 'u8[4096]{0}', space=vmem, size = 0x1000, scoped, tag = 'output window, operand 0, single buffered']
    %16 = vsyncpa [#allocation5], 0
    %17 = vsyncpa [#allocation8], 0
    %18 = vsyncpa [#allocation11], 0
    %19 = vsyncpa [#allocation14], 0
    %20 = vsyncpa [#allocation6], 0
    // Predicated region
    $region2: #{tpu_custom_call.1} parent=1 // pred_check
      _
    $region3: #{tpu_custom_call.1} parent=1 // pred_check_branch
      %22 = sbr.rel (0) target = $region5
    $region4: #{tpu_custom_call.1} parent=1 // pred_region
      %s24 = ssub.s32 512, 512
      %25 = vsyncadd [#allocation5], %s24
      %s26 = sshll.u32 [#allocation4], 4
      %s27 = int_to_ptr.vmem [resolvable:$true] %s26
      %32 = dma.hbm_to_vmem [thread:$0]  %s0, 512, %s27, [#allocation5], 64, 64, 4
    $region5: #{tpu_custom_call.1} parent=1 // pred_fallthru
      _
    // Predicated region
    $region6: #{tpu_custom_call.1} parent=1 // pred_check
      _
    $region7: #{tpu_custom_call.1} parent=1 // pred_check_branch
      %34 = sbr.rel (0) target = $region9
    $region8: #{tpu_custom_call.1} parent=1 // pred_region
      %s36 = ssub.s32 1024, 1024
      %37 = vsyncadd [#allocation8], %s36
      %s38 = sshll.u32 [#allocation7], 4
      %s39 = int_to_ptr.vmem [resolvable:$true] %s38
      %44 = dma.hbm_to_vmem [thread:$0]  %s1, 1024, %s39, [#allocation8], 64, 64, 4
    $region9: #{tpu_custom_call.1} parent=1 // pred_fallthru
      _
    // Predicated region
    $region10: #{tpu_custom_call.1} parent=1 // pred_check
      _
    $region11: #{tpu_custom_call.1} parent=1 // pred_check_branch
      %46 = sbr.rel (0) target = $region13
    $region12: #{tpu_custom_call.1} parent=1 // pred_region
      %s48 = ssub.s32 1024, 1024
      %49 = vsyncadd [#allocation8], %s48
      %s50 = sshll.u32 [#allocation9], 4
      %s51 = int_to_ptr.vmem [resolvable:$true] %s50
      %56 = dma.hbm_to_vmem [thread:$0]  %s2, 1024, %s51, [#allocation8], 64, 64, 4
    $region13: #{tpu_custom_call.1} parent=1 // pred_fallthru
      _
    // Predicated region
    $region14: #{tpu_custom_call.1} parent=1 // pred_check
      _
    $region15: #{tpu_custom_call.1} parent=1 // pred_check_branch
      %58 = sbr.rel (0) target = $region17
    $region16: #{tpu_custom_call.1} parent=1 // pred_region
      _
    $region17: #{tpu_custom_call.1} parent=1 // pred_fallthru
      _
    // Predicated region
    $region18: #{tpu_custom_call.1} parent=1 // pred_check
      _
    $region19: #{tpu_custom_call.1} parent=1 // pred_check_branch
      %60 = sbr.rel (0) target = $region21
    $region20: #{tpu_custom_call.1} parent=1 // pred_region
      _
    $region21: #{tpu_custom_call.1} parent=1 // pred_fallthru
      _
    // Predicated region
    $region22: #{tpu_custom_call.1} parent=1 // pred_check
      _
    $region23: #{tpu_custom_call.1} parent=1 // pred_check_branch
      %62 = sbr.rel (0) target = $region25
    $region24: #{tpu_custom_call.1} parent=1 // pred_region
      %s64 = ssub.s32 1024, 1024
      %65 = vsyncadd [#allocation11], %s64
      %s66 = sshll.u32 [#allocation10], 4
      %s67 = int_to_ptr.vmem [resolvable:$true] %s66
      %72 = dma.hbm_to_vmem [thread:$0]  %s5, 1024, %s67, [#allocation11], 64, 64, 4
    $region25: #{tpu_custom_call.1} parent=1 // pred_fallthru
      _
    // Predicated region
    $region26: #{tpu_custom_call.1} parent=1 // pred_check
      _
    $region27: #{tpu_custom_call.1} parent=1 // pred_check_branch
      %74 = sbr.rel (0) target = $region29
    $region28: #{tpu_custom_call.1} parent=1 // pred_region
      %s76 = ssub.s32 1024, 1024
      %77 = vsyncadd [#allocation11], %s76
      %s78 = sshll.u32 [#allocation12], 4
      %s79 = int_to_ptr.vmem [resolvable:$true] %s78
      %84 = dma.hbm_to_vmem [thread:$0]  %s6, 1024, %s79, [#allocation11], 64, 64, 4
    $region29: #{tpu_custom_call.1} parent=1 // pred_fallthru
      _
    // Predicated region
    $region30: #{tpu_custom_call.1} parent=1 // pred_check
      _
    $region31: #{tpu_custom_call.1} parent=1 // pred_check_branch
      %86 = sbr.rel (0) target = $region33
    $region32: #{tpu_custom_call.1} parent=1 // pred_region
      _
    $region33: #{tpu_custom_call.1} parent=1 // pred_fallthru
      _
    // Predicated region
    $region34: #{tpu_custom_call.1} parent=1 // pred_check
      _
    $region35: #{tpu_custom_call.1} parent=1 // pred_check_branch
      %88 = sbr.rel (0) target = $region37
    $region36: #{tpu_custom_call.1} parent=1 // pred_region
      _
    $region37: #{tpu_custom_call.1} parent=1 // pred_fallthru
      _
    // Predicated region
    $region38: #{tpu_custom_call.1} parent=1 // pred_check
      _
    $region39: #{tpu_custom_call.1} parent=1 // pred_check_branch
      %90 = sbr.rel (0) target = $region41
    $region40: #{tpu_custom_call.1} parent=1 // pred_region
      %s92 = ssub.s32 2048, 2048
      %93 = vsyncadd [#allocation14], %s92
      %s94 = sshll.u32 [#allocation13], 4
      %s95 = int_to_ptr.vmem [resolvable:$true] %s94
      %100 = dma.hbm_to_vmem [thread:$0]  %s9, 2048, %s95, [#allocation14], 128, 128, 8
    $region41: #{tpu_custom_call.1} parent=1 // pred_fallthru
      _
    // Predicated region
    $region42: #{tpu_custom_call.1} parent=1 // pred_check
      _
    $region43: #{tpu_custom_call.1} parent=1 // pred_check_branch
      %102 = sbr.rel (0) target = $region45
    $region44: #{tpu_custom_call.1} parent=1 // pred_region
      _
    $region45: #{tpu_custom_call.1} parent=1 // pred_fallthru
      _
    // Predicated region
    $region46: #{tpu_custom_call.1} parent=1 // pred_check
      _
    $region47: #{tpu_custom_call.1} parent=1 // pred_check_branch
      %104 = sbr.rel (0) target = $region49
    $region48: #{tpu_custom_call.1} parent=1 // pred_region
      %105 = dma.done [#allocation5], 512
    $region49: #{tpu_custom_call.1} parent=1 // pred_fallthru
      _
    // Predicated region
    $region50: #{tpu_custom_call.1} parent=1 // pred_check
      _
    $region51: #{tpu_custom_call.1} parent=1 // pred_check_branch
      %107 = sbr.rel (0) target = $region53
    $region52: #{tpu_custom_call.1} parent=1 // pred_region
      %108 = dma.done [#allocation8], 1024
    $region53: #{tpu_custom_call.1} parent=1 // pred_fallthru
      _
    // Predicated region
    $region54: #{tpu_custom_call.1} parent=1 // pred_check
      _
    $region55: #{tpu_custom_call.1} parent=1 // pred_check_branch
      %110 = sbr.rel (0) target = $region57
    $region56: #{tpu_custom_call.1} parent=1 // pred_region
      %111 = dma.done [#allocation8], 1024
    $region57: #{tpu_custom_call.1} parent=1 // pred_fallthru
      _
    // Predicated region
    $region58: #{tpu_custom_call.1} parent=1 // pred_check
      _
    $region59: #{tpu_custom_call.1} parent=1 // pred_check_branch
      %113 = sbr.rel (0) target = $region61
    $region60: #{tpu_custom_call.1} parent=1 // pred_region
      %114 = dma.done [#allocation11], 1024
    $region61: #{tpu_custom_call.1} parent=1 // pred_fallthru
      _
    // Predicated region
    $region62: #{tpu_custom_call.1} parent=1 // pred_check
      _
    $region63: #{tpu_custom_call.1} parent=1 // pred_check_branch
      %116 = sbr.rel (0) target = $region65
    $region64: #{tpu_custom_call.1} parent=1 // pred_region
      %117 = dma.done [#allocation11], 1024
    $region65: #{tpu_custom_call.1} parent=1 // pred_fallthru
      _
    // Predicated region
    $region66: #{tpu_custom_call.1} parent=1 // pred_check
      _
    $region67: #{tpu_custom_call.1} parent=1 // pred_check_branch
      %119 = sbr.rel (0) target = $region69
    $region68: #{tpu_custom_call.1} parent=1 // pred_region
      %120 = dma.done [#allocation14], 2048
    $region69: #{tpu_custom_call.1} parent=1 // pred_fallthru
      _
    %v122 = vld [vmem:[%s3] sm:$0x1]
    %v123 = vld [vmem:[%s4] sm:$0x1]
    %v124 = vld [vmem:[#allocation4] sm:$0xf]
    %v125 = vld [vmem:[#allocation4 + $0x4] sm:$0xf]
    %v126 = vld [vmem:[#allocation4 + $0x8] sm:$0xf]
    %v127 = vld [vmem:[#allocation4 + $0xc] sm:$0xf]
    %v128 = vld [vmem:[#allocation4 + $0x10] sm:$0xf]
    %v129 = vld [vmem:[#allocation4 + $0x14] sm:$0xf]
    %v130 = vld [vmem:[#allocation4 + $0x18] sm:$0xf]
    %v131 = vld [vmem:[#allocation4 + $0x1c] sm:$0xf]
    %v132 = vld [vmem:[#allocation7] sm:$0xf]
    %v133 = vld [vmem:[#allocation7 + $0x4] sm:$0xf]
    %v134 = vld [vmem:[#allocation7 + $0x8] sm:$0xf]
    %v135 = vld [vmem:[#allocation7 + $0xc] sm:$0xf]
    %v136 = vld [vmem:[#allocation7 + $0x10] sm:$0xf]
    %v137 = vld [vmem:[#allocation7 + $0x14] sm:$0xf]
    %v138 = vld [vmem:[#allocation7 + $0x18] sm:$0xf]
    %v139 = vld [vmem:[#allocation7 + $0x1c] sm:$0xf]
    %v140 = vld [vmem:[#allocation7 + $0x20] sm:$0xf]
    %v141 = vld [vmem:[#allocation7 + $0x24] sm:$0xf]
    %v142 = vld [vmem:[#allocation7 + $0x28] sm:$0xf]
    %v143 = vld [vmem:[#allocation7 + $0x2c] sm:$0xf]
    %v144 = vld [vmem:[#allocation7 + $0x30] sm:$0xf]
    %v145 = vld [vmem:[#allocation7 + $0x34] sm:$0xf]
    %v146 = vld [vmem:[#allocation7 + $0x38] sm:$0xf]
    %v147 = vld [vmem:[#allocation7 + $0x3c] sm:$0xf]
    %v149 = vlaneseq
    %v150 = vshrl.u32 %v149, 7
    %v151 = vsub.s32 0, %v150
    %v152 = vrot.slane %v122, %v151
    %v162 = vunpack.c.l.b16 %v124
    %v163 = vunpack.c.l.b16 %v125
    %v164 = vunpack.c.l.b16 %v126
    %v165 = vunpack.c.l.b16 %v127
    %v166 = vunpack.c.l.b16 %v128
    %v167 = vunpack.c.l.b16 %v129
    %v168 = vunpack.c.l.b16 %v130
    %v169 = vunpack.c.l.b16 %v131
    %v170 = vpack.c.b16 %v163, %v162
    %v171 = vpack.c.b16 %v165, %v164
    %v172 = vpack.c.b16 %v167, %v166
    %v173 = vpack.c.b16 %v169, %v168
    %v194 = vunpack.c.l.b16 %v132
    %v195 = vunpack.c.l.b16 %v133
    %v196 = vunpack.c.l.b16 %v134
    %v197 = vunpack.c.l.b16 %v135
    %v198 = vunpack.c.l.b16 %v136
    %v199 = vunpack.c.l.b16 %v137
    %v200 = vunpack.c.l.b16 %v138
    %v201 = vunpack.c.l.b16 %v139
    %v202 = vunpack.c.l.b16 %v140
    %v203 = vunpack.c.l.b16 %v141
    %v204 = vunpack.c.l.b16 %v142
    %v205 = vunpack.c.l.b16 %v143
    %v206 = vunpack.c.l.b16 %v144
    %v207 = vunpack.c.l.b16 %v145
    %v208 = vunpack.c.l.b16 %v146
    %v209 = vunpack.c.l.b16 %v147
    %v210 = vpack.c.b16 %v195, %v194
    %v211 = vpack.c.b16 %v197, %v196
    %v212 = vpack.c.b16 %v199, %v198
    %v213 = vpack.c.b16 %v201, %v200
    %v214 = vpack.c.b16 %v203, %v202
    %v215 = vpack.c.b16 %v205, %v204
    %v216 = vpack.c.b16 %v207, %v206
    %v217 = vpack.c.b16 %v209, %v208
    %226 = vmatprep.subr.bf16.mxu0 0
    %227 = vmatpush1.bf16.msra.mxu0 %v217
    %228 = vmatprep.subr.bf16.mxu0 0
    %229 = vmatpush1.bf16.msra.mxu0 %v216
    %230 = vmatprep.subr.bf16.mxu0 0
    %231 = vmatpush1.bf16.msra.mxu0 %v215
    %232 = vmatprep.subr.bf16.mxu0 0
    %233 = vmatpush1.bf16.msra.mxu0 %v214
    %234 = vmatprep.subr.bf16.mxu0 0
    %235 = vmatpush1.bf16.msra.mxu0 %v213
    %236 = vmatprep.subr.bf16.mxu0 0
    %237 = vmatpush1.bf16.msra.mxu0 %v212
    %238 = vmatprep.subr.bf16.mxu0 0
    %239 = vmatpush1.bf16.msra.mxu0 %v211
    %240 = vmatprep.subr.bf16.mxu0 0
    %241 = vmatpush1.bf16.msra.mxu0 %v210
    %242 = vmatprep.subr.bf16.mxu0 0
    %243 = vmatpush2.bf16.msra.mxu0 0
    %244 = vmatprep.subr.bf16.mxu0 0
    %245 = vmatpush2.bf16.msra.mxu0 0
    %246 = vmatprep.subr.bf16.mxu0 0
    %247 = vmatpush2.bf16.msra.mxu0 0
    %248 = vmatprep.subr.bf16.mxu0 0
    %249 = vmatpush2.bf16.msra.mxu0 0
    %250 = vmatprep.subr.bf16.mxu0 0
    %251 = vmatpush2.bf16.msra.mxu0 0
    %252 = vmatprep.subr.bf16.mxu0 0
    %253 = vmatpush2.bf16.msra.mxu0 0
    %254 = vmatprep.subr.bf16.mxu0 0
    %255 = vmatpush2.bf16.msra.mxu0 0
    %256 = vmatprep.subr.bf16.mxu0 0
    %257 = vmatpush2.bf16.msra.mxu0 0
    %258 = vmatprep.mubr.bf16.mxu0 0
    %259 = vmatmul.mubr.bf16.gmra.mxu0 %v170
    %v260 = vpop.f32.mrf.mxu0
    %v261 = vadd.f32 %v152, %v260
    %v262 = vpop.f32.mrf.mxu0
    %v263 = vpop.f32.mrf.mxu0
    %v264 = vadd.f32 %v152, %v263
    %v265 = vpop.f32.mrf.mxu0
    %266 = vmatprep.mubr.bf16.mxu0 0
    %267 = vmatmul.mubr.bf16.gmra.mxu0 %v171
    %v268 = vpop.f32.mrf.mxu0
    %v269 = vadd.f32 %v152, %v268
    %v270 = vpop.f32.mrf.mxu0
    %v271 = vpop.f32.mrf.mxu0
    %v272 = vadd.f32 %v152, %v271
    %v273 = vpop.f32.mrf.mxu0
    %274 = vmatprep.mubr.bf16.mxu0 0
    %275 = vmatmul.mubr.bf16.gmra.mxu0 %v172
    %v276 = vpop.f32.mrf.mxu0
    %v277 = vadd.f32 %v152, %v276
    %v278 = vpop.f32.mrf.mxu0
    %v279 = vpop.f32.mrf.mxu0
    %v280 = vadd.f32 %v152, %v279
    %v281 = vpop.f32.mrf.mxu0
    %282 = vmatprep.mubr.bf16.mxu0 0
    %283 = vmatmul.mubr.bf16.gmra.mxu0 %v173
    %v284 = vpop.f32.mrf.mxu0
    %v285 = vadd.f32 %v152, %v284
    %v286 = vpop.f32.mrf.mxu0
    %v287 = vpop.f32.mrf.mxu0
    %v288 = vadd.f32 %v152, %v287
    %v289 = vpop.f32.mrf.mxu0
    %290 = vdwg.mxu0
    %291 = vst [vmem:[#allocation2] sm:$0xff] %v261
    %292 = vst [vmem:[#allocation2 + $0x8] sm:$0xff] %v264
    %293 = vst [vmem:[#allocation2 + $0x10] sm:$0xff] %v269
    %294 = vst [vmem:[#allocation2 + $0x18] sm:$0xff] %v272
    %295 = vst [vmem:[#allocation2 + $0x20] sm:$0xff] %v277
    %296 = vst [vmem:[#allocation2 + $0x28] sm:$0xff] %v280
    %297 = vst [vmem:[#allocation2 + $0x30] sm:$0xff] %v285
    %298 = vst [vmem:[#allocation2 + $0x38] sm:$0xff] %v288
    %v299 = vld [vmem:[#allocation2] sm:$0xff]
    %v300 = vld [vmem:[#allocation9] sm:$0xf]
    %v301 = vld [vmem:[#allocation9 + $0x4] sm:$0xf]
    %v302 = vld [vmem:[#allocation9 + $0x8] sm:$0xf]
    %v303 = vld [vmem:[#allocation9 + $0xc] sm:$0xf]
    %v304 = vld [vmem:[#allocation9 + $0x10] sm:$0xf]
    %v305 = vld [vmem:[#allocation9 + $0x14] sm:$0xf]
    %v306 = vld [vmem:[#allocation9 + $0x18] sm:$0xf]
    %v307 = vld [vmem:[#allocation9 + $0x1c] sm:$0xf]
    %v308 = vld [vmem:[#allocation9 + $0x20] sm:$0xf]
    %v309 = vld [vmem:[#allocation9 + $0x24] sm:$0xf]
    %v310 = vld [vmem:[#allocation9 + $0x28] sm:$0xf]
    %v311 = vld [vmem:[#allocation9 + $0x2c] sm:$0xf]
    %v312 = vld [vmem:[#allocation9 + $0x30] sm:$0xf]
    %v313 = vld [vmem:[#allocation9 + $0x34] sm:$0xf]
    %v314 = vld [vmem:[#allocation9 + $0x38] sm:$0xf]
    %v315 = vld [vmem:[#allocation9 + $0x3c] sm:$0xf]
    %v317 = vlaneseq
    %v318 = vshrl.u32 %v317, 7
    %v319 = vsub.s32 0, %v318
    %v320 = vrot.slane %v123, %v319
    %v338 = vunpack.c.l.b16 %v300
    %v339 = vunpack.c.l.b16 %v301
    %v340 = vunpack.c.l.b16 %v302
    %v341 = vunpack.c.l.b16 %v303
    %v342 = vunpack.c.l.b16 %v304
    %v343 = vunpack.c.l.b16 %v305
    %v344 = vunpack.c.l.b16 %v306
    %v345 = vunpack.c.l.b16 %v307
    %v346 = vunpack.c.l.b16 %v308
    %v347 = vunpack.c.l.b16 %v309
    %v348 = vunpack.c.l.b16 %v310
    %v349 = vunpack.c.l.b16 %v311
    %v350 = vunpack.c.l.b16 %v312
    %v351 = vunpack.c.l.b16 %v313
    %v352 = vunpack.c.l.b16 %v314
    %v353 = vunpack.c.l.b16 %v315
    %v354 = vpack.c.b16 %v339, %v338
    %v355 = vpack.c.b16 %v341, %v340
    %v356 = vpack.c.b16 %v343, %v342
    %v357 = vpack.c.b16 %v345, %v344
    %v358 = vpack.c.b16 %v347, %v346
    %v359 = vpack.c.b16 %v349, %v348
    %v360 = vpack.c.b16 %v351, %v350
    %v361 = vpack.c.b16 %v353, %v352
    %370 = vmatprep.subr.bf16.mxu0 0
    %371 = vmatpush1.bf16.msra.mxu0 %v361
    %372 = vmatprep.subr.bf16.mxu0 0
    %373 = vmatpush1.bf16.msra.mxu0 %v360
    %374 = vmatprep.subr.bf16.mxu0 0
    %375 = vmatpush1.bf16.msra.mxu0 %v359
    %376 = vmatprep.subr.bf16.mxu0 0
    %377 = vmatpush1.bf16.msra.mxu0 %v358
    %378 = vmatprep.subr.bf16.mxu0 0
    %379 = vmatpush1.bf16.msra.mxu0 %v357
    %380 = vmatprep.subr.bf16.mxu0 0
    %381 = vmatpush1.bf16.msra.mxu0 %v356
    %382 = vmatprep.subr.bf16.mxu0 0
    %383 = vmatpush1.bf16.msra.mxu0 %v355
    %384 = vmatprep.subr.bf16.mxu0 0
    %385 = vmatpush1.bf16.msra.mxu0 %v354
    %386 = vmatprep.subr.bf16.mxu0 0
    %387 = vmatpush2.bf16.msra.mxu0 0
    %388 = vmatprep.subr.bf16.mxu0 0
    %389 = vmatpush2.bf16.msra.mxu0 0
    %390 = vmatprep.subr.bf16.mxu0 0
    %391 = vmatpush2.bf16.msra.mxu0 0
    %392 = vmatprep.subr.bf16.mxu0 0
    %393 = vmatpush2.bf16.msra.mxu0 0
    %394 = vmatprep.subr.bf16.mxu0 0
    %395 = vmatpush2.bf16.msra.mxu0 0
    %396 = vmatprep.subr.bf16.mxu0 0
    %397 = vmatpush2.bf16.msra.mxu0 0
    %398 = vmatprep.subr.bf16.mxu0 0
    %399 = vmatpush2.bf16.msra.mxu0 0
    %400 = vmatprep.subr.bf16.mxu0 0
    %401 = vmatpush2.bf16.msra.mxu0 0
    %402 = vmatprep.mubr.bf16.mxu0 0
    %403 = vmatmul.mubr.bf16.gmra.mxu0 0
    %v404 = vpop.f32.mrf.mxu0
    %v405 = vadd.f32 %v320, %v404
    %v406 = vpop.f32.mrf.mxu0
    %v407 = vpop.f32.mrf.mxu0
    %v408 = vpop.f32.mrf.mxu0
    %409 = vdwg.mxu0
    %v410 = vadd.f32 %v299, %v405
    %v411 = vxor.u32 %v410, 2147483648
    %v412 = vmul.f32 %v411, 1.442695
    %v413 = vpow.pop %v412
    %v414 = vadd.f32 %v413, 1.0
    %v415 = vrcp.pop %v414
    %v416 = vmul.f32 1.0, %v415
    %417 = vrot.lane.b32.xlu0 %v416, 32
    %v418 = vpop.permute.xlu0 %417
    %v419 = vmul.f32 %v418, %v405
    %v420 = vadd.f32 %v299, %v419
    %v421 = vtanh.pop %v420
    %422 = vrot.lane.b32.xlu0 %v421, 32
    %v423 = vpop.permute.xlu0 %422
    %v424 = vsub.f32 0.0, %v423
    %v425 = vmul.f32 %v416, %v424
    %v426 = vadd.f32 %v423, %v425
    %v427 = vpack.c.bf16 %v426, %v426
    %428 = vst [vmem:[#allocation3] sm:$0xf] %v427
    %s429 = scalar_lea.vmem [#allocation2], 8
    %v430 = vld [vmem:[%s429] sm:$0xff]
    %v431 = vld [vmem:[#allocation9] sm:$0xf]
    %v432 = vld [vmem:[#allocation9 + $0x4] sm:$0xf]
    %v433 = vld [vmem:[#allocation9 + $0x8] sm:$0xf]
    %v434 = vld [vmem:[#allocation9 + $0xc] sm:$0xf]
    %v435 = vld [vmem:[#allocation9 + $0x10] sm:$0xf]
    %v436 = vld [vmem:[#allocation9 + $0x14] sm:$0xf]
    %v437 = vld [vmem:[#allocation9 + $0x18] sm:$0xf]
    %v438 = vld [vmem:[#allocation9 + $0x1c] sm:$0xf]
    %v439 = vld [vmem:[#allocation9 + $0x20] sm:$0xf]
    %v440 = vld [vmem:[#allocation9 + $0x24] sm:$0xf]
    %v441 = vld [vmem:[#allocation9 + $0x28] sm:$0xf]
    %v442 = vld [vmem:[#allocation9 + $0x2c] sm:$0xf]
    %v443 = vld [vmem:[#allocation9 + $0x30] sm:$0xf]
    %v444 = vld [vmem:[#allocation9 + $0x34] sm:$0xf]
    %v445 = vld [vmem:[#allocation9 + $0x38] sm:$0xf]
    %v446 = vld [vmem:[#allocation9 + $0x3c] sm:$0xf]
    %v463 = vunpack.c.l.b16 %v431
    %v464 = vunpack.c.l.b16 %v432
    %v465 = vunpack.c.l.b16 %v433
    %v466 = vunpack.c.l.b16 %v434
    %v467 = vunpack.c.l.b16 %v435
    %v468 = vunpack.c.l.b16 %v436
    %v469 = vunpack.c.l.b16 %v437
    %v470 = vunpack.c.l.b16 %v438
    %v471 = vunpack.c.l.b16 %v439
    %v472 = vunpack.c.l.b16 %v440
    %v473 = vunpack.c.l.b16 %v441
    %v474 = vunpack.c.l.b16 %v442
    %v475 = vunpack.c.l.b16 %v443
    %v476 = vunpack.c.l.b16 %v444
    %v477 = vunpack.c.l.b16 %v445
    %v478 = vunpack.c.l.b16 %v446
    %v479 = vpack.c.b16 %v464, %v463
    %v480 = vpack.c.b16 %v466, %v465
    %v481 = vpack.c.b16 %v468, %v467
    %v482 = vpack.c.b16 %v470, %v469
    %v483 = vpack.c.b16 %v472, %v471
    %v484 = vpack.c.b16 %v474, %v473
    %v485 = vpack.c.b16 %v476, %v475
    %v486 = vpack.c.b16 %v478, %v477
    %495 = vmatprep.subr.bf16.mxu0 0
    %496 = vmatpush1.bf16.msra.mxu0 %v486
    %497 = vmatprep.subr.bf16.mxu0 0
    %498 = vmatpush1.bf16.msra.mxu0 %v485
    %499 = vmatprep.subr.bf16.mxu0 0
    %500 = vmatpush1.bf16.msra.mxu0 %v484
    %501 = vmatprep.subr.bf16.mxu0 0
    %502 = vmatpush1.bf16.msra.mxu0 %v483
    %503 = vmatprep.subr.bf16.mxu0 0
    %504 = vmatpush1.bf16.msra.mxu0 %v482
    %505 = vmatprep.subr.bf16.mxu0 0
    %506 = vmatpush1.bf16.msra.mxu0 %v481
    %507 = vmatprep.subr.bf16.mxu0 0
    %508 = vmatpush1.bf16.msra.mxu0 %v480
    %509 = vmatprep.subr.bf16.mxu0 0
    %510 = vmatpush1.bf16.msra.mxu0 %v479
    %511 = vmatprep.subr.bf16.mxu0 0
    %512 = vmatpush2.bf16.msra.mxu0 0
    %513 = vmatprep.subr.bf16.mxu0 0
    %514 = vmatpush2.bf16.msra.mxu0 0
    %515 = vmatprep.subr.bf16.mxu0 0
    %516 = vmatpush2.bf16.msra.mxu0 0
    %517 = vmatprep.subr.bf16.mxu0 0
    %518 = vmatpush2.bf16.msra.mxu0 0
    %519 = vmatprep.subr.bf16.mxu0 0
    %520 = vmatpush2.bf16.msra.mxu0 0
    %521 = vmatprep.subr.bf16.mxu0 0
    %522 = vmatpush2.bf16.msra.mxu0 0
    %523 = vmatprep.subr.bf16.mxu0 0
    %524 = vmatpush2.bf16.msra.mxu0 0
    %525 = vmatprep.subr.bf16.mxu0 0
    %526 = vmatpush2.bf16.msra.mxu0 0
    %527 = vmatprep.mubr.bf16.mxu0 0
    %528 = vmatmul.mubr.bf16.gmra.mxu0 %v427
    %v529 = vpop.f32.mrf.mxu0
    %v530 = vadd.f32 %v320, %v529
    %v531 = vpop.f32.mrf.mxu0
    %v532 = vpop.f32.mrf.mxu0
    %v533 = vpop.f32.mrf.mxu0
    %534 = vdwg.mxu0
    %v535 = vadd.f32 %v430, %v530
    %v536 = vxor.u32 %v535, 2147483648
    %v537 = vmul.f32 %v536, 1.442695
    %v538 = vpow.pop %v537
    %v539 = vadd.f32 %v538, 1.0
    %v540 = vrcp.pop %v539
    %v541 = vmul.f32 1.0, %v540
    %542 = vrot.lane.b32.xlu0 %v541, 32
    %v543 = vpop.permute.xlu0 %542
    %v544 = vmul.f32 %v543, %v530
    %v545 = vadd.f32 %v430, %v544
    %v546 = vtanh.pop %v545
    %547 = vrot.lane.b32.xlu0 %v546, 32
    %v548 = vpop.permute.xlu0 %547
    %v549 = vsub.f32 %v426, %v548
    %v550 = vmul.f32 %v541, %v549
    %v551 = vadd.f32 %v548, %v550
    %v552 = vpack.c.bf16 %v551, %v551
    %s553 = scalar_lea.vmem [#allocation3], 4
    %554 = vst [vmem:[%s553] sm:$0xf] %v552
    %s555 = scalar_lea.vmem [#allocation2], 16
    %v556 = vld [vmem:[%s555] sm:$0xff]
    %v557 = vld [vmem:[#allocation9] sm:$0xf]
    %v558 = vld [vmem:[#allocation9 + $0x4] sm:$0xf]
    %v559 = vld [vmem:[#allocation9 + $0x8] sm:$0xf]
    %v560 = vld [vmem:[#allocation9 + $0xc] sm:$0xf]
    %v561 = vld [vmem:[#allocation9 + $0x10] sm:$0xf]
    %v562 = vld [vmem:[#allocation9 + $0x14] sm:$0xf]
    %v563 = vld [vmem:[#allocation9 + $0x18] sm:$0xf]
    %v564 = vld [vmem:[#allocation9 + $0x1c] sm:$0xf]
    %v565 = vld [vmem:[#allocation9 + $0x20] sm:$0xf]
    %v566 = vld [vmem:[#allocation9 + $0x24] sm:$0xf]
    %v567 = vld [vmem:[#allocation9 + $0x28] sm:$0xf]
    %v568 = vld [vmem:[#allocation9 + $0x2c] sm:$0xf]
    %v569 = vld [vmem:[#allocation9 + $0x30] sm:$0xf]
    %v570 = vld [vmem:[#allocation9 + $0x34] sm:$0xf]
    %v571 = vld [vmem:[#allocation9 + $0x38] sm:$0xf]
    %v572 = vld [vmem:[#allocation9 + $0x3c] sm:$0xf]
    %v589 = vunpack.c.l.b16 %v557
    %v590 = vunpack.c.l.b16 %v558
    %v591 = vunpack.c.l.b16 %v559
    %v592 = vunpack.c.l.b16 %v560
    %v593 = vunpack.c.l.b16 %v561
    %v594 = vunpack.c.l.b16 %v562
    %v595 = vunpack.c.l.b16 %v563
    %v596 = vunpack.c.l.b16 %v564
    %v597 = vunpack.c.l.b16 %v565
    %v598 = vunpack.c.l.b16 %v566
    %v599 = vunpack.c.l.b16 %v567
    %v600 = vunpack.c.l.b16 %v568
    %v601 = vunpack.c.l.b16 %v569
    %v602 = vunpack.c.l.b16 %v570
    %v603 = vunpack.c.l.b16 %v571
    %v604 = vunpack.c.l.b16 %v572
    %v605 = vpack.c.b16 %v590, %v589
    %v606 = vpack.c.b16 %v592, %v591
    %v607 = vpack.c.b16 %v594, %v593
    %v608 = vpack.c.b16 %v596, %v595
    %v609 = vpack.c.b16 %v598, %v597
    %v610 = vpack.c.b16 %v600, %v599
    %v611 = vpack.c.b16 %v602, %v601
    %v612 = vpack.c.b16 %v604, %v603
    %621 = vmatprep.subr.bf16.mxu0 0
    %622 = vmatpush1.bf16.msra.mxu0 %v612
    %623 = vmatprep.subr.bf16.mxu0 0
    %624 = vmatpush1.bf16.msra.mxu0 %v611
    %625 = vmatprep.subr.bf16.mxu0 0
    %626 = vmatpush1.bf16.msra.mxu0 %v610
    %627 = vmatprep.subr.bf16.mxu0 0
    %628 = vmatpush1.bf16.msra.mxu0 %v609
    %629 = vmatprep.subr.bf16.mxu0 0
    %630 = vmatpush1.bf16.msra.mxu0 %v608
    %631 = vmatprep.subr.bf16.mxu0 0
    %632 = vmatpush1.bf16.msra.mxu0 %v607
    %633 = vmatprep.subr.bf16.mxu0 0
    %634 = vmatpush1.bf16.msra.mxu0 %v606
    %635 = vmatprep.subr.bf16.mxu0 0
    %636 = vmatpush1.bf16.msra.mxu0 %v605
    %637 = vmatprep.subr.bf16.mxu0 0
    %638 = vmatpush2.bf16.msra.mxu0 0
    %639 = vmatprep.subr.bf16.mxu0 0
    %640 = vmatpush2.bf16.msra.mxu0 0
    %641 = vmatprep.subr.bf16.mxu0 0
    %642 = vmatpush2.bf16.msra.mxu0 0
    %643 = vmatprep.subr.bf16.mxu0 0
    %644 = vmatpush2.bf16.msra.mxu0 0
    %645 = vmatprep.subr.bf16.mxu0 0
    %646 = vmatpush2.bf16.msra.mxu0 0
    %647 = vmatprep.subr.bf16.mxu0 0
    %648 = vmatpush2.bf16.msra.mxu0 0
    %649 = vmatprep.subr.bf16.mxu0 0
    %650 = vmatpush2.bf16.msra.mxu0 0
    %651 = vmatprep.subr.bf16.mxu0 0
    %652 = vmatpush2.bf16.msra.mxu0 0
    %653 = vmatprep.mubr.bf16.mxu0 0
    %654 = vmatmul.mubr.bf16.gmra.mxu0 %v552
    %v655 = vpop.f32.mrf.mxu0
    %v656 = vadd.f32 %v320, %v655
    %v657 = vpop.f32.mrf.mxu0
    %v658 = vpop.f32.mrf.mxu0
    %v659 = vpop.f32.mrf.mxu0
    %660 = vdwg.mxu0
    %v661 = vadd.f32 %v556, %v656
    %v662 = vxor.u32 %v661, 2147483648
    %v663 = vmul.f32 %v662, 1.442695
    %v664 = vpow.pop %v663
    %v665 = vadd.f32 %v664, 1.0
    %v666 = vrcp.pop %v665
    %v667 = vmul.f32 1.0, %v666
    %668 = vrot.lane.b32.xlu0 %v667, 32
    %v669 = vpop.permute.xlu0 %668
    %v670 = vmul.f32 %v669, %v656
    %v671 = vadd.f32 %v556, %v670
    %v672 = vtanh.pop %v671
    %673 = vrot.lane.b32.xlu0 %v672, 32
    %v674 = vpop.permute.xlu0 %673
    %v675 = vsub.f32 %v551, %v674
    %v676 = vmul.f32 %v667, %v675
    %v677 = vadd.f32 %v674, %v676
    %v678 = vpack.c.bf16 %v677, %v677
    %s679 = scalar_lea.vmem [#allocation3], 8
    %680 = vst [vmem:[%s679] sm:$0xf] %v678
    %s681 = scalar_lea.vmem [#allocation2], 24
    %v682 = vld [vmem:[%s681] sm:$0xff]
    %v683 = vld [vmem:[#allocation9] sm:$0xf]
    %v684 = vld [vmem:[#allocation9 + $0x4] sm:$0xf]
    %v685 = vld [vmem:[#allocation9 + $0x8] sm:$0xf]
    %v686 = vld [vmem:[#allocation9 + $0xc] sm:$0xf]
    %v687 = vld [vmem:[#allocation9 + $0x10] sm:$0xf]
    %v688 = vld [vmem:[#allocation9 + $0x14] sm:$0xf]
    %v689 = vld [vmem:[#allocation9 + $0x18] sm:$0xf]
    %v690 = vld [vmem:[#allocation9 + $0x1c] sm:$0xf]
    %v691 = vld [vmem:[#allocation9 + $0x20] sm:$0xf]
    %v692 = vld [vmem:[#allocation9 + $0x24] sm:$0xf]
    %v693 = vld [vmem:[#allocation9 + $0x28] sm:$0xf]
    %v694 = vld [vmem:[#allocation9 + $0x2c] sm:$0xf]
    %v695 = vld [vmem:[#allocation9 + $0x30] sm:$0xf]
    %v696 = vld [vmem:[#allocation9 + $0x34] sm:$0xf]
    %v697 = vld [vmem:[#allocation9 + $0x38] sm:$0xf]
    %v698 = vld [vmem:[#allocation9 + $0x3c] sm:$0xf]
    %v715 = vunpack.c.l.b16 %v683
    %v716 = vunpack.c.l.b16 %v684
    %v717 = vunpack.c.l.b16 %v685
    %v718 = vunpack.c.l.b16 %v686
    %v719 = vunpack.c.l.b16 %v687
    %v720 = vunpack.c.l.b16 %v688
    %v721 = vunpack.c.l.b16 %v689
    %v722 = vunpack.c.l.b16 %v690
    %v723 = vunpack.c.l.b16 %v691
    %v724 = vunpack.c.l.b16 %v692
    %v725 = vunpack.c.l.b16 %v693
    %v726 = vunpack.c.l.b16 %v694
    %v727 = vunpack.c.l.b16 %v695
    %v728 = vunpack.c.l.b16 %v696
    %v729 = vunpack.c.l.b16 %v697
    %v730 = vunpack.c.l.b16 %v698
    %v731 = vpack.c.b16 %v716, %v715
    %v732 = vpack.c.b16 %v718, %v717
    %v733 = vpack.c.b16 %v720, %v719
    %v734 = vpack.c.b16 %v722, %v721
    %v735 = vpack.c.b16 %v724, %v723
    %v736 = vpack.c.b16 %v726, %v725
    %v737 = vpack.c.b16 %v728, %v727
    %v738 = vpack.c.b16 %v730, %v729
    %747 = vmatprep.subr.bf16.mxu0 0
    %748 = vmatpush1.bf16.msra.mxu0 %v738
    %749 = vmatprep.subr.bf16.mxu0 0
    %750 = vmatpush1.bf16.msra.mxu0 %v737
    %751 = vmatprep.subr.bf16.mxu0 0
    %752 = vmatpush1.bf16.msra.mxu0 %v736
    %753 = vmatprep.subr.bf16.mxu0 0
    %754 = vmatpush1.bf16.msra.mxu0 %v735
    %755 = vmatprep.subr.bf16.mxu0 0
    %756 = vmatpush1.bf16.msra.mxu0 %v734
    %757 = vmatprep.subr.bf16.mxu0 0
    %758 = vmatpush1.bf16.msra.mxu0 %v733
    %759 = vmatprep.subr.bf16.mxu0 0
    %760 = vmatpush1.bf16.msra.mxu0 %v732
    %761 = vmatprep.subr.bf16.mxu0 0
    %762 = vmatpush1.bf16.msra.mxu0 %v731
    %763 = vmatprep.subr.bf16.mxu0 0
    %764 = vmatpush2.bf16.msra.mxu0 0
    %765 = vmatprep.subr.bf16.mxu0 0
    %766 = vmatpush2.bf16.msra.mxu0 0
    %767 = vmatprep.subr.bf16.mxu0 0
    %768 = vmatpush2.bf16.msra.mxu0 0
    %769 = vmatprep.subr.bf16.mxu0 0
    %770 = vmatpush2.bf16.msra.mxu0 0
    %771 = vmatprep.subr.bf16.mxu0 0
    %772 = vmatpush2.bf16.msra.mxu0 0
    %773 = vmatprep.subr.bf16.mxu0 0
    %774 = vmatpush2.bf16.msra.mxu0 0
    %775 = vmatprep.subr.bf16.mxu0 0
    %776 = vmatpush2.bf16.msra.mxu0 0
    %777 = vmatprep.subr.bf16.mxu0 0
    %778 = vmatpush2.bf16.msra.mxu0 0
    %779 = vmatprep.mubr.bf16.mxu0 0
    %780 = vmatmul.mubr.bf16.gmra.mxu0 %v678
    %v781 = vpop.f32.mrf.mxu0
    %v782 = vadd.f32 %v320, %v781
    %v783 = vpop.f32.mrf.mxu0
    %v784 = vpop.f32.mrf.mxu0
    %v785 = vpop.f32.mrf.mxu0
    %786 = vdwg.mxu0
    %v787 = vadd.f32 %v682, %v782
    %v788 = vxor.u32 %v787, 2147483648
    %v789 = vmul.f32 %v788, 1.442695
    %v790 = vpow.pop %v789
    %v791 = vadd.f32 %v790, 1.0
    %v792 = vrcp.pop %v791
    %v793 = vmul.f32 1.0, %v792
    %794 = vrot.lane.b32.xlu0 %v793, 32
    %v795 = vpop.permute.xlu0 %794
    %v796 = vmul.f32 %v795, %v782
    %v797 = vadd.f32 %v682, %v796
    %v798 = vtanh.pop %v797
    %799 = vrot.lane.b32.xlu0 %v798, 32
    %v800 = vpop.permute.xlu0 %799
    %v801 = vsub.f32 %v677, %v800
    %v802 = vmul.f32 %v793, %v801
    %v803 = vadd.f32 %v800, %v802
    %v804 = vpack.c.bf16 %v803, %v803
    %s805 = scalar_lea.vmem [#allocation3], 12
    %806 = vst [vmem:[%s805] sm:$0xf] %v804
    %s807 = scalar_lea.vmem [#allocation2], 32
    %v808 = vld [vmem:[%s807] sm:$0xff]
    %v809 = vld [vmem:[#allocation9] sm:$0xf]
    %v810 = vld [vmem:[#allocation9 + $0x4] sm:$0xf]
    %v811 = vld [vmem:[#allocation9 + $0x8] sm:$0xf]
    %v812 = vld [vmem:[#allocation9 + $0xc] sm:$0xf]
    %v813 = vld [vmem:[#allocation9 + $0x10] sm:$0xf]
    %v814 = vld [vmem:[#allocation9 + $0x14] sm:$0xf]
    %v815 = vld [vmem:[#allocation9 + $0x18] sm:$0xf]
    %v816 = vld [vmem:[#allocation9 + $0x1c] sm:$0xf]
    %v817 = vld [vmem:[#allocation9 + $0x20] sm:$0xf]
    %v818 = vld [vmem:[#allocation9 + $0x24] sm:$0xf]
    %v819 = vld [vmem:[#allocation9 + $0x28] sm:$0xf]
    %v820 = vld [vmem:[#allocation9 + $0x2c] sm:$0xf]
    %v821 = vld [vmem:[#allocation9 + $0x30] sm:$0xf]
    %v822 = vld [vmem:[#allocation9 + $0x34] sm:$0xf]
    %v823 = vld [vmem:[#allocation9 + $0x38] sm:$0xf]
    %v824 = vld [vmem:[#allocation9 + $0x3c] sm:$0xf]
    %v841 = vunpack.c.l.b16 %v809
    %v842 = vunpack.c.l.b16 %v810
    %v843 = vunpack.c.l.b16 %v811
    %v844 = vunpack.c.l.b16 %v812
    %v845 = vunpack.c.l.b16 %v813
    %v846 = vunpack.c.l.b16 %v814
    %v847 = vunpack.c.l.b16 %v815
    %v848 = vunpack.c.l.b16 %v816
    %v849 = vunpack.c.l.b16 %v817
    %v850 = vunpack.c.l.b16 %v818
    %v851 = vunpack.c.l.b16 %v819
    %v852 = vunpack.c.l.b16 %v820
    %v853 = vunpack.c.l.b16 %v821
    %v854 = vunpack.c.l.b16 %v822
    %v855 = vunpack.c.l.b16 %v823
    %v856 = vunpack.c.l.b16 %v824
    %v857 = vpack.c.b16 %v842, %v841
    %v858 = vpack.c.b16 %v844, %v843
    %v859 = vpack.c.b16 %v846, %v845
    %v860 = vpack.c.b16 %v848, %v847
    %v861 = vpack.c.b16 %v850, %v849
    %v862 = vpack.c.b16 %v852, %v851
    %v863 = vpack.c.b16 %v854, %v853
    %v864 = vpack.c.b16 %v856, %v855
    %873 = vmatprep.subr.bf16.mxu0 0
    %874 = vmatpush1.bf16.msra.mxu0 %v864
    %875 = vmatprep.subr.bf16.mxu0 0
    %876 = vmatpush1.bf16.msra.mxu0 %v863
    %877 = vmatprep.subr.bf16.mxu0 0
    %878 = vmatpush1.bf16.msra.mxu0 %v862
    %879 = vmatprep.subr.bf16.mxu0 0
    %880 = vmatpush1.bf16.msra.mxu0 %v861
    %881 = vmatprep.subr.bf16.mxu0 0
    %882 = vmatpush1.bf16.msra.mxu0 %v860
    %883 = vmatprep.subr.bf16.mxu0 0
    %884 = vmatpush1.bf16.msra.mxu0 %v859
    %885 = vmatprep.subr.bf16.mxu0 0
    %886 = vmatpush1.bf16.msra.mxu0 %v858
    %887 = vmatprep.subr.bf16.mxu0 0
    %888 = vmatpush1.bf16.msra.mxu0 %v857
    %889 = vmatprep.subr.bf16.mxu0 0
    %890 = vmatpush2.bf16.msra.mxu0 0
    %891 = vmatprep.subr.bf16.mxu0 0
    %892 = vmatpush2.bf16.msra.mxu0 0
    %893 = vmatprep.subr.bf16.mxu0 0
    %894 = vmatpush2.bf16.msra.mxu0 0
    %895 = vmatprep.subr.bf16.mxu0 0
    %896 = vmatpush2.bf16.msra.mxu0 0
    %897 = vmatprep.subr.bf16.mxu0 0
    %898 = vmatpush2.bf16.msra.mxu0 0
    %899 = vmatprep.subr.bf16.mxu0 0
    %900 = vmatpush2.bf16.msra.mxu0 0
    %901 = vmatprep.subr.bf16.mxu0 0
    %902 = vmatpush2.bf16.msra.mxu0 0
    %903 = vmatprep.subr.bf16.mxu0 0
    %904 = vmatpush2.bf16.msra.mxu0 0
    %905 = vmatprep.mubr.bf16.mxu0 0
    %906 = vmatmul.mubr.bf16.gmra.mxu0 %v804
    %v907 = vpop.f32.mrf.mxu0
    %v908 = vadd.f32 %v320, %v907
    %v909 = vpop.f32.mrf.mxu0
    %v910 = vpop.f32.mrf.mxu0
    %v911 = vpop.f32.mrf.mxu0
    %912 = vdwg.mxu0
    %v913 = vadd.f32 %v808, %v908
    %v914 = vxor.u32 %v913, 2147483648
    %v915 = vmul.f32 %v914, 1.442695
    %v916 = vpow.pop %v915
    %v917 = vadd.f32 %v916, 1.0
    %v918 = vrcp.pop %v917
    %v919 = vmul.f32 1.0, %v918
    %920 = vrot.lane.b32.xlu0 %v919, 32
    %v921 = vpop.permute.xlu0 %920
    %v922 = vmul.f32 %v921, %v908
    %v923 = vadd.f32 %v808, %v922
    %v924 = vtanh.pop %v923
    %925 = vrot.lane.b32.xlu0 %v924, 32
    %v926 = vpop.permute.xlu0 %925
    %v927 = vsub.f32 %v803, %v926
    %v928 = vmul.f32 %v919, %v927
    %v929 = vadd.f32 %v926, %v928
    %v930 = vpack.c.bf16 %v929, %v929
    %s931 = scalar_lea.vmem [#allocation3], 16
    %932 = vst [vmem:[%s931] sm:$0xf] %v930
    %s933 = scalar_lea.vmem [#allocation2], 40
    %v934 = vld [vmem:[%s933] sm:$0xff]
    %v935 = vld [vmem:[#allocation9] sm:$0xf]
    %v936 = vld [vmem:[#allocation9 + $0x4] sm:$0xf]
    %v937 = vld [vmem:[#allocation9 + $0x8] sm:$0xf]
    %v938 = vld [vmem:[#allocation9 + $0xc] sm:$0xf]
    %v939 = vld [vmem:[#allocation9 + $0x10] sm:$0xf]
    %v940 = vld [vmem:[#allocation9 + $0x14] sm:$0xf]
    %v941 = vld [vmem:[#allocation9 + $0x18] sm:$0xf]
    %v942 = vld [vmem:[#allocation9 + $0x1c] sm:$0xf]
    %v943 = vld [vmem:[#allocation9 + $0x20] sm:$0xf]
    %v944 = vld [vmem:[#allocation9 + $0x24] sm:$0xf]
    %v945 = vld [vmem:[#allocation9 + $0x28] sm:$0xf]
    %v946 = vld [vmem:[#allocation9 + $0x2c] sm:$0xf]
    %v947 = vld [vmem:[#allocation9 + $0x30] sm:$0xf]
    %v948 = vld [vmem:[#allocation9 + $0x34] sm:$0xf]
    %v949 = vld [vmem:[#allocation9 + $0x38] sm:$0xf]
    %v950 = vld [vmem:[#allocation9 + $0x3c] sm:$0xf]
    %v967 = vunpack.c.l.b16 %v935
    %v968 = vunpack.c.l.b16 %v936
    %v969 = vunpack.c.l.b16 %v937
    %v970 = vunpack.c.l.b16 %v938
    %v971 = vunpack.c.l.b16 %v939
    %v972 = vunpack.c.l.b16 %v940
    %v973 = vunpack.c.l.b16 %v941
    %v974 = vunpack.c.l.b16 %v942
    %v975 = vunpack.c.l.b16 %v943
    %v976 = vunpack.c.l.b16 %v944
    %v977 = vunpack.c.l.b16 %v945
    %v978 = vunpack.c.l.b16 %v946
    %v979 = vunpack.c.l.b16 %v947
    %v980 = vunpack.c.l.b16 %v948
    %v981 = vunpack.c.l.b16 %v949
    %v982 = vunpack.c.l.b16 %v950
    %v983 = vpack.c.b16 %v968, %v967
    %v984 = vpack.c.b16 %v970, %v969
    %v985 = vpack.c.b16 %v972, %v971
    %v986 = vpack.c.b16 %v974, %v973
    %v987 = vpack.c.b16 %v976, %v975
    %v988 = vpack.c.b16 %v978, %v977
    %v989 = vpack.c.b16 %v980, %v979
    %v990 = vpack.c.b16 %v982, %v981
    %999 = vmatprep.subr.bf16.mxu0 0
    %1000 = vmatpush1.bf16.msra.mxu0 %v990
    %1001 = vmatprep.subr.bf16.mxu0 0
    %1002 = vmatpush1.bf16.msra.mxu0 %v989
    %1003 = vmatprep.subr.bf16.mxu0 0
    %1004 = vmatpush1.bf16.msra.mxu0 %v988
    %1005 = vmatprep.subr.bf16.mxu0 0
    %1006 = vmatpush1.bf16.msra.mxu0 %v987
    %1007 = vmatprep.subr.bf16.mxu0 0
    %1008 = vmatpush1.bf16.msra.mxu0 %v986
    %1009 = vmatprep.subr.bf16.mxu0 0
    %1010 = vmatpush1.bf16.msra.mxu0 %v985
    %1011 = vmatprep.subr.bf16.mxu0 0
    %1012 = vmatpush1.bf16.msra.mxu0 %v984
    %1013 = vmatprep.subr.bf16.mxu0 0
    %1014 = vmatpush1.bf16.msra.mxu0 %v983
    %1015 = vmatprep.subr.bf16.mxu0 0
    %1016 = vmatpush2.bf16.msra.mxu0 0
    %1017 = vmatprep.subr.bf16.mxu0 0
    %1018 = vmatpush2.bf16.msra.mxu0 0
    %1019 = vmatprep.subr.bf16.mxu0 0
    %1020 = vmatpush2.bf16.msra.mxu0 0
    %1021 = vmatprep.subr.bf16.mxu0 0
    %1022 = vmatpush2.bf16.msra.mxu0 0
    %1023 = vmatprep.subr.bf16.mxu0 0
    %1024 = vmatpush2.bf16.msra.mxu0 0
    %1025 = vmatprep.subr.bf16.mxu0 0
    %1026 = vmatpush2.bf16.msra.mxu0 0
    %1027 = vmatprep.subr.bf16.mxu0 0
    %1028 = vmatpush2.bf16.msra.mxu0 0
    %1029 = vmatprep.subr.bf16.mxu0 0
    %1030 = vmatpush2.bf16.msra.mxu0 0
    %1031 = vmatprep.mubr.bf16.mxu0 0
    %1032 = vmatmul.mubr.bf16.gmra.mxu0 %v930
    %v1033 = vpop.f32.mrf.mxu0
    %v1034 = vadd.f32 %v320, %v1033
    %v1035 = vpop.f32.mrf.mxu0
    %v1036 = vpop.f32.mrf.mxu0
    %v1037 = vpop.f32.mrf.mxu0
    %1038 = vdwg.mxu0
    %v1039 = vadd.f32 %v934, %v1034
    %v1040 = vxor.u32 %v1039, 2147483648
    %v1041 = vmul.f32 %v1040, 1.442695
    %v1042 = vpow.pop %v1041
    %v1043 = vadd.f32 %v1042, 1.0
    %v1044 = vrcp.pop %v1043
    %v1045 = vmul.f32 1.0, %v1044
    %1046 = vrot.lane.b32.xlu0 %v1045, 32
    %v1047 = vpop.permute.xlu0 %1046
    %v1048 = vmul.f32 %v1047, %v1034
    %v1049 = vadd.f32 %v934, %v1048
    %v1050 = vtanh.pop %v1049
    %1051 = vrot.lane.b32.xlu0 %v1050, 32
    %v1052 = vpop.permute.xlu0 %1051
    %v1053 = vsub.f32 %v929, %v1052
    %v1054 = vmul.f32 %v1045, %v1053
    %v1055 = vadd.f32 %v1052, %v1054
    %v1056 = vpack.c.bf16 %v1055, %v1055
    %s1057 = scalar_lea.vmem [#allocation3], 20
    %1058 = vst [vmem:[%s1057] sm:$0xf] %v1056
    %s1059 = scalar_lea.vmem [#allocation2], 48
    %v1060 = vld [vmem:[%s1059] sm:$0xff]
    %v1061 = vld [vmem:[#allocation9] sm:$0xf]
    %v1062 = vld [vmem:[#allocation9 + $0x4] sm:$0xf]
    %v1063 = vld [vmem:[#allocation9 + $0x8] sm:$0xf]
    %v1064 = vld [vmem:[#allocation9 + $0xc] sm:$0xf]
    %v1065 = vld [vmem:[#allocation9 + $0x10] sm:$0xf]
    %v1066 = vld [vmem:[#allocation9 + $0x14] sm:$0xf]
    %v1067 = vld [vmem:[#allocation9 + $0x18] sm:$0xf]
    %v1068 = vld [vmem:[#allocation9 + $0x1c] sm:$0xf]
    %v1069 = vld [vmem:[#allocation9 + $0x20] sm:$0xf]
    %v1070 = vld [vmem:[#allocation9 + $0x24] sm:$0xf]
    %v1071 = vld [vmem:[#allocation9 + $0x28] sm:$0xf]
    %v1072 = vld [vmem:[#allocation9 + $0x2c] sm:$0xf]
    %v1073 = vld [vmem:[#allocation9 + $0x30] sm:$0xf]
    %v1074 = vld [vmem:[#allocation9 + $0x34] sm:$0xf]
    %v1075 = vld [vmem:[#allocation9 + $0x38] sm:$0xf]
    %v1076 = vld [vmem:[#allocation9 + $0x3c] sm:$0xf]
    %v1093 = vunpack.c.l.b16 %v1061
    %v1094 = vunpack.c.l.b16 %v1062
    %v1095 = vunpack.c.l.b16 %v1063
    %v1096 = vunpack.c.l.b16 %v1064
    %v1097 = vunpack.c.l.b16 %v1065
    %v1098 = vunpack.c.l.b16 %v1066
    %v1099 = vunpack.c.l.b16 %v1067
    %v1100 = vunpack.c.l.b16 %v1068
    %v1101 = vunpack.c.l.b16 %v1069
    %v1102 = vunpack.c.l.b16 %v1070
    %v1103 = vunpack.c.l.b16 %v1071
    %v1104 = vunpack.c.l.b16 %v1072
    %v1105 = vunpack.c.l.b16 %v1073
    %v1106 = vunpack.c.l.b16 %v1074
    %v1107 = vunpack.c.l.b16 %v1075
    %v1108 = vunpack.c.l.b16 %v1076
    %v1109 = vpack.c.b16 %v1094, %v1093
    %v1110 = vpack.c.b16 %v1096, %v1095
    %v1111 = vpack.c.b16 %v1098, %v1097
    %v1112 = vpack.c.b16 %v1100, %v1099
    %v1113 = vpack.c.b16 %v1102, %v1101
    %v1114 = vpack.c.b16 %v1104, %v1103
    %v1115 = vpack.c.b16 %v1106, %v1105
    %v1116 = vpack.c.b16 %v1108, %v1107
    %1125 = vmatprep.subr.bf16.mxu0 0
    %1126 = vmatpush1.bf16.msra.mxu0 %v1116
    %1127 = vmatprep.subr.bf16.mxu0 0
    %1128 = vmatpush1.bf16.msra.mxu0 %v1115
    %1129 = vmatprep.subr.bf16.mxu0 0
    %1130 = vmatpush1.bf16.msra.mxu0 %v1114
    %1131 = vmatprep.subr.bf16.mxu0 0
    %1132 = vmatpush1.bf16.msra.mxu0 %v1113
    %1133 = vmatprep.subr.bf16.mxu0 0
    %1134 = vmatpush1.bf16.msra.mxu0 %v1112
    %1135 = vmatprep.subr.bf16.mxu0 0
    %1136 = vmatpush1.bf16.msra.mxu0 %v1111
    %1137 = vmatprep.subr.bf16.mxu0 0
    %1138 = vmatpush1.bf16.msra.mxu0 %v1110
    %1139 = vmatprep.subr.bf16.mxu0 0
    %1140 = vmatpush1.bf16.msra.mxu0 %v1109
    %1141 = vmatprep.subr.bf16.mxu0 0
    %1142 = vmatpush2.bf16.msra.mxu0 0
    %1143 = vmatprep.subr.bf16.mxu0 0
    %1144 = vmatpush2.bf16.msra.mxu0 0
    %1145 = vmatprep.subr.bf16.mxu0 0
    %1146 = vmatpush2.bf16.msra.mxu0 0
    %1147 = vmatprep.subr.bf16.mxu0 0
    %1148 = vmatpush2.bf16.msra.mxu0 0
    %1149 = vmatprep.subr.bf16.mxu0 0
    %1150 = vmatpush2.bf16.msra.mxu0 0
    %1151 = vmatprep.subr.bf16.mxu0 0
    %1152 = vmatpush2.bf16.msra.mxu0 0
    %1153 = vmatprep.subr.bf16.mxu0 0
    %1154 = vmatpush2.bf16.msra.mxu0 0
    %1155 = vmatprep.subr.bf16.mxu0 0
    %1156 = vmatpush2.bf16.msra.mxu0 0
    %1157 = vmatprep.mubr.bf16.mxu0 0
    %1158 = vmatmul.mubr.bf16.gmra.mxu0 %v1056
    %v1159 = vpop.f32.mrf.mxu0
    %v1160 = vadd.f32 %v320, %v1159
    %v1161 = vpop.f32.mrf.mxu0
    %v1162 = vpop.f32.mrf.mxu0
    %v1163 = vpop.f32.mrf.mxu0
    %1164 = vdwg.mxu0
    %v1165 = vadd.f32 %v1060, %v1160
    %v1166 = vxor.u32 %v1165, 2147483648
    %v1167 = vmul.f32 %v1166, 1.442695
    %v1168 = vpow.pop %v1167
    %v1169 = vadd.f32 %v1168, 1.0
    %v1170 = vrcp.pop %v1169
    %v1171 = vmul.f32 1.0, %v1170
    %1172 = vrot.lane.b32.xlu0 %v1171, 32
    %v1173 = vpop.permute.xlu0 %1172
    %v1174 = vmul.f32 %v1173, %v1160
    %v1175 = vadd.f32 %v1060, %v1174
    %v1176 = vtanh.pop %v1175
    %1177 = vrot.lane.b32.xlu0 %v1176, 32
    %v1178 = vpop.permute.xlu0 %1177
    %v1179 = vsub.f32 %v1055, %v1178
    %v1180 = vmul.f32 %v1171, %v1179
    %v1181 = vadd.f32 %v1178, %v1180
    %v1182 = vpack.c.bf16 %v1181, %v1181
    %s1183 = scalar_lea.vmem [#allocation3], 24
    %1184 = vst [vmem:[%s1183] sm:$0xf] %v1182
    %s1185 = scalar_lea.vmem [#allocation2], 56
    %v1186 = vld [vmem:[%s1185] sm:$0xff]
    %v1187 = vld [vmem:[#allocation9] sm:$0xf]
    %v1188 = vld [vmem:[#allocation9 + $0x4] sm:$0xf]
    %v1189 = vld [vmem:[#allocation9 + $0x8] sm:$0xf]
    %v1190 = vld [vmem:[#allocation9 + $0xc] sm:$0xf]
    %v1191 = vld [vmem:[#allocation9 + $0x10] sm:$0xf]
    %v1192 = vld [vmem:[#allocation9 + $0x14] sm:$0xf]
    %v1193 = vld [vmem:[#allocation9 + $0x18] sm:$0xf]
    %v1194 = vld [vmem:[#allocation9 + $0x1c] sm:$0xf]
    %v1195 = vld [vmem:[#allocation9 + $0x20] sm:$0xf]
    %v1196 = vld [vmem:[#allocation9 + $0x24] sm:$0xf]
    %v1197 = vld [vmem:[#allocation9 + $0x28] sm:$0xf]
    %v1198 = vld [vmem:[#allocation9 + $0x2c] sm:$0xf]
    %v1199 = vld [vmem:[#allocation9 + $0x30] sm:$0xf]
    %v1200 = vld [vmem:[#allocation9 + $0x34] sm:$0xf]
    %v1201 = vld [vmem:[#allocation9 + $0x38] sm:$0xf]
    %v1202 = vld [vmem:[#allocation9 + $0x3c] sm:$0xf]
    %v1219 = vunpack.c.l.b16 %v1187
    %v1220 = vunpack.c.l.b16 %v1188
    %v1221 = vunpack.c.l.b16 %v1189
    %v1222 = vunpack.c.l.b16 %v1190
    %v1223 = vunpack.c.l.b16 %v1191
    %v1224 = vunpack.c.l.b16 %v1192
    %v1225 = vunpack.c.l.b16 %v1193
    %v1226 = vunpack.c.l.b16 %v1194
    %v1227 = vunpack.c.l.b16 %v1195
    %v1228 = vunpack.c.l.b16 %v1196
    %v1229 = vunpack.c.l.b16 %v1197
    %v1230 = vunpack.c.l.b16 %v1198
    %v1231 = vunpack.c.l.b16 %v1199
    %v1232 = vunpack.c.l.b16 %v1200
    %v1233 = vunpack.c.l.b16 %v1201
    %v1234 = vunpack.c.l.b16 %v1202
    %v1235 = vpack.c.b16 %v1220, %v1219
    %v1236 = vpack.c.b16 %v1222, %v1221
    %v1237 = vpack.c.b16 %v1224, %v1223
    %v1238 = vpack.c.b16 %v1226, %v1225
    %v1239 = vpack.c.b16 %v1228, %v1227
    %v1240 = vpack.c.b16 %v1230, %v1229
    %v1241 = vpack.c.b16 %v1232, %v1231
    %v1242 = vpack.c.b16 %v1234, %v1233
    %1251 = vmatprep.subr.bf16.mxu0 0
    %1252 = vmatpush1.bf16.msra.mxu0 %v1242
    %1253 = vmatprep.subr.bf16.mxu0 0
    %1254 = vmatpush1.bf16.msra.mxu0 %v1241
    %1255 = vmatprep.subr.bf16.mxu0 0
    %1256 = vmatpush1.bf16.msra.mxu0 %v1240
    %1257 = vmatprep.subr.bf16.mxu0 0
    %1258 = vmatpush1.bf16.msra.mxu0 %v1239
    %1259 = vmatprep.subr.bf16.mxu0 0
    %1260 = vmatpush1.bf16.msra.mxu0 %v1238
    %1261 = vmatprep.subr.bf16.mxu0 0
    %1262 = vmatpush1.bf16.msra.mxu0 %v1237
    %1263 = vmatprep.subr.bf16.mxu0 0
    %1264 = vmatpush1.bf16.msra.mxu0 %v1236
    %1265 = vmatprep.subr.bf16.mxu0 0
    %1266 = vmatpush1.bf16.msra.mxu0 %v1235
    %1267 = vmatprep.subr.bf16.mxu0 0
    %1268 = vmatpush2.bf16.msra.mxu0 0
    %1269 = vmatprep.subr.bf16.mxu0 0
    %1270 = vmatpush2.bf16.msra.mxu0 0
    %1271 = vmatprep.subr.bf16.mxu0 0
    %1272 = vmatpush2.bf16.msra.mxu0 0
    %1273 = vmatprep.subr.bf16.mxu0 0
    %1274 = vmatpush2.bf16.msra.mxu0 0
    %1275 = vmatprep.subr.bf16.mxu0 0
    %1276 = vmatpush2.bf16.msra.mxu0 0
    %1277 = vmatprep.subr.bf16.mxu0 0
    %1278 = vmatpush2.bf16.msra.mxu0 0
    %1279 = vmatprep.subr.bf16.mxu0 0
    %1280 = vmatpush2.bf16.msra.mxu0 0
    %1281 = vmatprep.subr.bf16.mxu0 0
    %1282 = vmatpush2.bf16.msra.mxu0 0
    %1283 = vmatprep.mubr.bf16.mxu0 0
    %1284 = vmatmul.mubr.bf16.gmra.mxu0 %v1182
    %v1285 = vpop.f32.mrf.mxu0
    %v1286 = vadd.f32 %v320, %v1285
    %v1287 = vpop.f32.mrf.mxu0
    %v1288 = vpop.f32.mrf.mxu0
    %v1289 = vpop.f32.mrf.mxu0
    %1290 = vdwg.mxu0
    %v1291 = vadd.f32 %v1186, %v1286
    %v1292 = vxor.u32 %v1291, 2147483648
    %v1293 = vmul.f32 %v1292, 1.442695
    %v1294 = vpow.pop %v1293
    %v1295 = vadd.f32 %v1294, 1.0
    %v1296 = vrcp.pop %v1295
    %v1297 = vmul.f32 1.0, %v1296
    %1298 = vrot.lane.b32.xlu0 %v1297, 32
    %v1299 = vpop.permute.xlu0 %1298
    %v1300 = vmul.f32 %v1299, %v1286
    %v1301 = vadd.f32 %v1186, %v1300
    %v1302 = vtanh.pop %v1301
    %1303 = vrot.lane.b32.xlu0 %v1302, 32
    %v1304 = vpop.permute.xlu0 %1303
    %v1305 = vsub.f32 %v1181, %v1304
    %v1306 = vmul.f32 %v1297, %v1305
    %v1307 = vadd.f32 %v1304, %v1306
    %v1308 = vpack.c.bf16 %v1307, %v1307
    %s1309 = scalar_lea.vmem [#allocation3], 28
    %1310 = vst [vmem:[%s1309] sm:$0xf] %v1308
    %v1311 = vld [vmem:[%s7] sm:$0x1]
    %v1312 = vld [vmem:[%s8] sm:$0x1]
    %v1313 = vld [vmem:[#allocation3] sm:$0xf]
    %v1314 = vld [vmem:[#allocation3 + $0x4] sm:$0xf]
    %v1315 = vld [vmem:[#allocation3 + $0x8] sm:$0xf]
    %v1316 = vld [vmem:[#allocation3 + $0xc] sm:$0xf]
    %v1317 = vld [vmem:[#allocation3 + $0x10] sm:$0xf]
    %v1318 = vld [vmem:[#allocation3 + $0x14] sm:$0xf]
    %v1319 = vld [vmem:[#allocation3 + $0x18] sm:$0xf]
    %v1320 = vld [vmem:[#allocation3 + $0x1c] sm:$0xf]
    %v1321 = vld [vmem:[#allocation10] sm:$0xf]
    %v1322 = vld [vmem:[#allocation10 + $0x4] sm:$0xf]
    %v1323 = vld [vmem:[#allocation10 + $0x8] sm:$0xf]
    %v1324 = vld [vmem:[#allocation10 + $0xc] sm:$0xf]
    %v1325 = vld [vmem:[#allocation10 + $0x10] sm:$0xf]
    %v1326 = vld [vmem:[#allocation10 + $0x14] sm:$0xf]
    %v1327 = vld [vmem:[#allocation10 + $0x18] sm:$0xf]
    %v1328 = vld [vmem:[#allocation10 + $0x1c] sm:$0xf]
    %v1329 = vld [vmem:[#allocation10 + $0x20] sm:$0xf]
    %v1330 = vld [vmem:[#allocation10 + $0x24] sm:$0xf]
    %v1331 = vld [vmem:[#allocation10 + $0x28] sm:$0xf]
    %v1332 = vld [vmem:[#allocation10 + $0x2c] sm:$0xf]
    %v1333 = vld [vmem:[#allocation10 + $0x30] sm:$0xf]
    %v1334 = vld [vmem:[#allocation10 + $0x34] sm:$0xf]
    %v1335 = vld [vmem:[#allocation10 + $0x38] sm:$0xf]
    %v1336 = vld [vmem:[#allocation10 + $0x3c] sm:$0xf]
    %v1338 = vlaneseq
    %v1339 = vshrl.u32 %v1338, 7
    %v1340 = vsub.s32 0, %v1339
    %v1341 = vrot.slane %v1311, %v1340
    %v1351 = vunpack.c.l.b16 %v1313
    %v1352 = vunpack.c.l.b16 %v1314
    %v1353 = vunpack.c.l.b16 %v1315
    %v1354 = vunpack.c.l.b16 %v1316
    %v1355 = vunpack.c.l.b16 %v1317
    %v1356 = vunpack.c.l.b16 %v1318
    %v1357 = vunpack.c.l.b16 %v1319
    %v1358 = vunpack.c.l.b16 %v1320
    %v1359 = vpack.c.b16 %v1352, %v1351
    %v1360 = vpack.c.b16 %v1354, %v1353
    %v1361 = vpack.c.b16 %v1356, %v1355
    %v1362 = vpack.c.b16 %v1358, %v1357
    %v1383 = vunpack.c.l.b16 %v1321
    %v1384 = vunpack.c.l.b16 %v1322
    %v1385 = vunpack.c.l.b16 %v1323
    %v1386 = vunpack.c.l.b16 %v1324
    %v1387 = vunpack.c.l.b16 %v1325
    %v1388 = vunpack.c.l.b16 %v1326
    %v1389 = vunpack.c.l.b16 %v1327
    %v1390 = vunpack.c.l.b16 %v1328
    %v1391 = vunpack.c.l.b16 %v1329
    %v1392 = vunpack.c.l.b16 %v1330
    %v1393 = vunpack.c.l.b16 %v1331
    %v1394 = vunpack.c.l.b16 %v1332
    %v1395 = vunpack.c.l.b16 %v1333
    %v1396 = vunpack.c.l.b16 %v1334
    %v1397 = vunpack.c.l.b16 %v1335
    %v1398 = vunpack.c.l.b16 %v1336
    %v1399 = vpack.c.b16 %v1384, %v1383
    %v1400 = vpack.c.b16 %v1386, %v1385
    %v1401 = vpack.c.b16 %v1388, %v1387
    %v1402 = vpack.c.b16 %v1390, %v1389
    %v1403 = vpack.c.b16 %v1392, %v1391
    %v1404 = vpack.c.b16 %v1394, %v1393
    %v1405 = vpack.c.b16 %v1396, %v1395
    %v1406 = vpack.c.b16 %v1398, %v1397
    %1415 = vmatprep.subr.bf16.mxu0 0
    %1416 = vmatpush1.bf16.msra.mxu0 %v1406
    %1417 = vmatprep.subr.bf16.mxu0 0
    %1418 = vmatpush1.bf16.msra.mxu0 %v1405
    %1419 = vmatprep.subr.bf16.mxu0 0
    %1420 = vmatpush1.bf16.msra.mxu0 %v1404
    %1421 = vmatprep.subr.bf16.mxu0 0
    %1422 = vmatpush1.bf16.msra.mxu0 %v1403
    %1423 = vmatprep.subr.bf16.mxu0 0
    %1424 = vmatpush1.bf16.msra.mxu0 %v1402
    %1425 = vmatprep.subr.bf16.mxu0 0
    %1426 = vmatpush1.bf16.msra.mxu0 %v1401
    %1427 = vmatprep.subr.bf16.mxu0 0
    %1428 = vmatpush1.bf16.msra.mxu0 %v1400
    %1429 = vmatprep.subr.bf16.mxu0 0
    %1430 = vmatpush1.bf16.msra.mxu0 %v1399
    %1431 = vmatprep.subr.bf16.mxu0 0
    %1432 = vmatpush2.bf16.msra.mxu0 0
    %1433 = vmatprep.subr.bf16.mxu0 0
    %1434 = vmatpush2.bf16.msra.mxu0 0
    %1435 = vmatprep.subr.bf16.mxu0 0
    %1436 = vmatpush2.bf16.msra.mxu0 0
    %1437 = vmatprep.subr.bf16.mxu0 0
    %1438 = vmatpush2.bf16.msra.mxu0 0
    %1439 = vmatprep.subr.bf16.mxu0 0
    %1440 = vmatpush2.bf16.msra.mxu0 0
    %1441 = vmatprep.subr.bf16.mxu0 0
    %1442 = vmatpush2.bf16.msra.mxu0 0
    %1443 = vmatprep.subr.bf16.mxu0 0
    %1444 = vmatpush2.bf16.msra.mxu0 0
    %1445 = vmatprep.subr.bf16.mxu0 0
    %1446 = vmatpush2.bf16.msra.mxu0 0
    %1447 = vmatprep.mubr.bf16.mxu0 0
    %1448 = vmatmul.mubr.bf16.gmra.mxu0 %v1359
    %v1449 = vpop.f32.mrf.mxu0
    %v1450 = vadd.f32 %v1341, %v1449
    %v1451 = vpop.f32.mrf.mxu0
    %v1452 = vpop.f32.mrf.mxu0
    %v1453 = vadd.f32 %v1341, %v1452
    %v1454 = vpop.f32.mrf.mxu0
    %1455 = vmatprep.mubr.bf16.mxu0 0
    %1456 = vmatmul.mubr.bf16.gmra.mxu0 %v1360
    %v1457 = vpop.f32.mrf.mxu0
    %v1458 = vadd.f32 %v1341, %v1457
    %v1459 = vpop.f32.mrf.mxu0
    %v1460 = vpop.f32.mrf.mxu0
    %v1461 = vadd.f32 %v1341, %v1460
    %v1462 = vpop.f32.mrf.mxu0
    %1463 = vmatprep.mubr.bf16.mxu0 0
    %1464 = vmatmul.mubr.bf16.gmra.mxu0 %v1361
    %v1465 = vpop.f32.mrf.mxu0
    %v1466 = vadd.f32 %v1341, %v1465
    %v1467 = vpop.f32.mrf.mxu0
    %v1468 = vpop.f32.mrf.mxu0
    %v1469 = vadd.f32 %v1341, %v1468
    %v1470 = vpop.f32.mrf.mxu0
    %1471 = vmatprep.mubr.bf16.mxu0 0
    %1472 = vmatmul.mubr.bf16.gmra.mxu0 %v1362
    %v1473 = vpop.f32.mrf.mxu0
    %v1474 = vadd.f32 %v1341, %v1473
    %v1475 = vpop.f32.mrf.mxu0
    %v1476 = vpop.f32.mrf.mxu0
    %v1477 = vadd.f32 %v1341, %v1476
    %v1478 = vpop.f32.mrf.mxu0
    %1479 = vdwg.mxu0
    %1480 = vst [vmem:[#allocation2] sm:$0xff] %v1450
    %1481 = vst [vmem:[#allocation2 + $0x8] sm:$0xff] %v1453
    %1482 = vst [vmem:[#allocation2 + $0x10] sm:$0xff] %v1458
    %1483 = vst [vmem:[#allocation2 + $0x18] sm:$0xff] %v1461
    %1484 = vst [vmem:[#allocation2 + $0x20] sm:$0xff] %v1466
    %1485 = vst [vmem:[#allocation2 + $0x28] sm:$0xff] %v1469
    %1486 = vst [vmem:[#allocation2 + $0x30] sm:$0xff] %v1474
    %1487 = vst [vmem:[#allocation2 + $0x38] sm:$0xff] %v1477
    %v1488 = vld [vmem:[#allocation2] sm:$0xff]
    %v1489 = vld [vmem:[#allocation12] sm:$0xf]
    %v1490 = vld [vmem:[#allocation12 + $0x4] sm:$0xf]
    %v1491 = vld [vmem:[#allocation12 + $0x8] sm:$0xf]
    %v1492 = vld [vmem:[#allocation12 + $0xc] sm:$0xf]
    %v1493 = vld [vmem:[#allocation12 + $0x10] sm:$0xf]
    %v1494 = vld [vmem:[#allocation12 + $0x14] sm:$0xf]
    %v1495 = vld [vmem:[#allocation12 + $0x18] sm:$0xf]
    %v1496 = vld [vmem:[#allocation12 + $0x1c] sm:$0xf]
    %v1497 = vld [vmem:[#allocation12 + $0x20] sm:$0xf]
    %v1498 = vld [vmem:[#allocation12 + $0x24] sm:$0xf]
    %v1499 = vld [vmem:[#allocation12 + $0x28] sm:$0xf]
    %v1500 = vld [vmem:[#allocation12 + $0x2c] sm:$0xf]
    %v1501 = vld [vmem:[#allocation12 + $0x30] sm:$0xf]
    %v1502 = vld [vmem:[#allocation12 + $0x34] sm:$0xf]
    %v1503 = vld [vmem:[#allocation12 + $0x38] sm:$0xf]
    %v1504 = vld [vmem:[#allocation12 + $0x3c] sm:$0xf]
    %v1506 = vlaneseq
    %v1507 = vshrl.u32 %v1506, 7
    %v1508 = vsub.s32 0, %v1507
    %v1509 = vrot.slane %v1312, %v1508
    %v1527 = vunpack.c.l.b16 %v1489
    %v1528 = vunpack.c.l.b16 %v1490
    %v1529 = vunpack.c.l.b16 %v1491
    %v1530 = vunpack.c.l.b16 %v1492
    %v1531 = vunpack.c.l.b16 %v1493
    %v1532 = vunpack.c.l.b16 %v1494
    %v1533 = vunpack.c.l.b16 %v1495
    %v1534 = vunpack.c.l.b16 %v1496
    %v1535 = vunpack.c.l.b16 %v1497
    %v1536 = vunpack.c.l.b16 %v1498
    %v1537 = vunpack.c.l.b16 %v1499
    %v1538 = vunpack.c.l.b16 %v1500
    %v1539 = vunpack.c.l.b16 %v1501
    %v1540 = vunpack.c.l.b16 %v1502
    %v1541 = vunpack.c.l.b16 %v1503
    %v1542 = vunpack.c.l.b16 %v1504
    %v1543 = vpack.c.b16 %v1528, %v1527
    %v1544 = vpack.c.b16 %v1530, %v1529
    %v1545 = vpack.c.b16 %v1532, %v1531
    %v1546 = vpack.c.b16 %v1534, %v1533
    %v1547 = vpack.c.b16 %v1536, %v1535
    %v1548 = vpack.c.b16 %v1538, %v1537
    %v1549 = vpack.c.b16 %v1540, %v1539
    %v1550 = vpack.c.b16 %v1542, %v1541
    %1559 = vmatprep.subr.bf16.mxu0 0
    %1560 = vmatpush1.bf16.msra.mxu0 %v1550
    %1561 = vmatprep.subr.bf16.mxu0 0
    %1562 = vmatpush1.bf16.msra.mxu0 %v1549
    %1563 = vmatprep.subr.bf16.mxu0 0
    %1564 = vmatpush1.bf16.msra.mxu0 %v1548
    %1565 = vmatprep.subr.bf16.mxu0 0
    %1566 = vmatpush1.bf16.msra.mxu0 %v1547
    %1567 = vmatprep.subr.bf16.mxu0 0
    %1568 = vmatpush1.bf16.msra.mxu0 %v1546
    %1569 = vmatprep.subr.bf16.mxu0 0
    %1570 = vmatpush1.bf16.msra.mxu0 %v1545
    %1571 = vmatprep.subr.bf16.mxu0 0
    %1572 = vmatpush1.bf16.msra.mxu0 %v1544
    %1573 = vmatprep.subr.bf16.mxu0 0
    %1574 = vmatpush1.bf16.msra.mxu0 %v1543
    %1575 = vmatprep.subr.bf16.mxu0 0
    %1576 = vmatpush2.bf16.msra.mxu0 0
    %1577 = vmatprep.subr.bf16.mxu0 0
    %1578 = vmatpush2.bf16.msra.mxu0 0
    %1579 = vmatprep.subr.bf16.mxu0 0
    %1580 = vmatpush2.bf16.msra.mxu0 0
    %1581 = vmatprep.subr.bf16.mxu0 0
    %1582 = vmatpush2.bf16.msra.mxu0 0
    %1583 = vmatprep.subr.bf16.mxu0 0
    %1584 = vmatpush2.bf16.msra.mxu0 0
    %1585 = vmatprep.subr.bf16.mxu0 0
    %1586 = vmatpush2.bf16.msra.mxu0 0
    %1587 = vmatprep.subr.bf16.mxu0 0
    %1588 = vmatpush2.bf16.msra.mxu0 0
    %1589 = vmatprep.subr.bf16.mxu0 0
    %1590 = vmatpush2.bf16.msra.mxu0 0
    %1591 = vmatprep.mubr.bf16.mxu0 0
    %1592 = vmatmul.mubr.bf16.gmra.mxu0 0
    %v1593 = vpop.f32.mrf.mxu0
    %v1594 = vadd.f32 %v1509, %v1593
    %v1595 = vpop.f32.mrf.mxu0
    %v1596 = vpop.f32.mrf.mxu0
    %v1597 = vpop.f32.mrf.mxu0
    %1598 = vdwg.mxu0
    %v1599 = vadd.f32 %v1488, %v1594
    %v1600 = vxor.u32 %v1599, 2147483648
    %v1601 = vmul.f32 %v1600, 1.442695
    %v1602 = vpow.pop %v1601
    %v1603 = vadd.f32 %v1602, 1.0
    %v1604 = vrcp.pop %v1603
    %v1605 = vmul.f32 1.0, %v1604
    %1606 = vrot.lane.b32.xlu0 %v1605, 32
    %v1607 = vpop.permute.xlu0 %1606
    %v1608 = vmul.f32 %v1607, %v1594
    %v1609 = vadd.f32 %v1488, %v1608
    %v1610 = vtanh.pop %v1609
    %1611 = vrot.lane.b32.xlu0 %v1610, 32
    %v1612 = vpop.permute.xlu0 %1611
    %v1613 = vsub.f32 0.0, %v1612
    %v1614 = vmul.f32 %v1605, %v1613
    %v1615 = vadd.f32 %v1612, %v1614
    %v1616 = vld [vmem:[%s429] sm:$0xff]
    %v1617 = vpack.c.bf16 %v1615, %v1615
    %1618 = vmatprep.subr.bf16.mxu0 0
    %1619 = vmatpush1.bf16.msra.mxu0 %v1550
    %1620 = vmatprep.subr.bf16.mxu0 0
    %1621 = vmatpush1.bf16.msra.mxu0 %v1549
    %1622 = vmatprep.subr.bf16.mxu0 0
    %1623 = vmatpush1.bf16.msra.mxu0 %v1548
    %1624 = vmatprep.subr.bf16.mxu0 0
    %1625 = vmatpush1.bf16.msra.mxu0 %v1547
    %1626 = vmatprep.subr.bf16.mxu0 0
    %1627 = vmatpush1.bf16.msra.mxu0 %v1546
    %1628 = vmatprep.subr.bf16.mxu0 0
    %1629 = vmatpush1.bf16.msra.mxu0 %v1545
    %1630 = vmatprep.subr.bf16.mxu0 0
    %1631 = vmatpush1.bf16.msra.mxu0 %v1544
    %1632 = vmatprep.subr.bf16.mxu0 0
    %1633 = vmatpush1.bf16.msra.mxu0 %v1543
    %1634 = vmatprep.subr.bf16.mxu0 0
    %1635 = vmatpush2.bf16.msra.mxu0 0
    %1636 = vmatprep.subr.bf16.mxu0 0
    %1637 = vmatpush2.bf16.msra.mxu0 0
    %1638 = vmatprep.subr.bf16.mxu0 0
    %1639 = vmatpush2.bf16.msra.mxu0 0
    %1640 = vmatprep.subr.bf16.mxu0 0
    %1641 = vmatpush2.bf16.msra.mxu0 0
    %1642 = vmatprep.subr.bf16.mxu0 0
    %1643 = vmatpush2.bf16.msra.mxu0 0
    %1644 = vmatprep.subr.bf16.mxu0 0
    %1645 = vmatpush2.bf16.msra.mxu0 0
    %1646 = vmatprep.subr.bf16.mxu0 0
    %1647 = vmatpush2.bf16.msra.mxu0 0
    %1648 = vmatprep.subr.bf16.mxu0 0
    %1649 = vmatpush2.bf16.msra.mxu0 0
    %1650 = vmatprep.mubr.bf16.mxu0 0
    %1651 = vmatmul.mubr.bf16.gmra.mxu0 %v1617
    %v1652 = vpop.f32.mrf.mxu0
    %v1653 = vadd.f32 %v1509, %v1652
    %v1654 = vpop.f32.mrf.mxu0
    %v1655 = vpop.f32.mrf.mxu0
    %v1656 = vpop.f32.mrf.mxu0
    %1657 = vdwg.mxu0
    %v1658 = vadd.f32 %v1616, %v1653
    %v1659 = vxor.u32 %v1658, 2147483648
    %v1660 = vmul.f32 %v1659, 1.442695
    %v1661 = vpow.pop %v1660
    %v1662 = vadd.f32 %v1661, 1.0
    %v1663 = vrcp.pop %v1662
    %v1664 = vmul.f32 1.0, %v1663
    %1665 = vrot.lane.b32.xlu0 %v1664, 32
    %v1666 = vpop.permute.xlu0 %1665
    %v1667 = vmul.f32 %v1666, %v1653
    %v1668 = vadd.f32 %v1616, %v1667
    %v1669 = vtanh.pop %v1668
    %1670 = vrot.lane.b32.xlu0 %v1669, 32
    %v1671 = vpop.permute.xlu0 %1670
    %v1672 = vsub.f32 %v1615, %v1671
    %v1673 = vmul.f32 %v1664, %v1672
    %v1674 = vadd.f32 %v1671, %v1673
    %v1675 = vld [vmem:[%s555] sm:$0xff]
    %v1676 = vpack.c.bf16 %v1674, %v1674
    %1677 = vmatprep.subr.bf16.mxu0 0
    %1678 = vmatpush1.bf16.msra.mxu0 %v1550
    %1679 = vmatprep.subr.bf16.mxu0 0
    %1680 = vmatpush1.bf16.msra.mxu0 %v1549
    %1681 = vmatprep.subr.bf16.mxu0 0
    %1682 = vmatpush1.bf16.msra.mxu0 %v1548
    %1683 = vmatprep.subr.bf16.mxu0 0
    %1684 = vmatpush1.bf16.msra.mxu0 %v1547
    %1685 = vmatprep.subr.bf16.mxu0 0
    %1686 = vmatpush1.bf16.msra.mxu0 %v1546
    %1687 = vmatprep.subr.bf16.mxu0 0
    %1688 = vmatpush1.bf16.msra.mxu0 %v1545
    %1689 = vmatprep.subr.bf16.mxu0 0
    %1690 = vmatpush1.bf16.msra.mxu0 %v1544
    %1691 = vmatprep.subr.bf16.mxu0 0
    %1692 = vmatpush1.bf16.msra.mxu0 %v1543
    %1693 = vmatprep.subr.bf16.mxu0 0
    %1694 = vmatpush2.bf16.msra.mxu0 0
    %1695 = vmatprep.subr.bf16.mxu0 0
    %1696 = vmatpush2.bf16.msra.mxu0 0
    %1697 = vmatprep.subr.bf16.mxu0 0
    %1698 = vmatpush2.bf16.msra.mxu0 0
    %1699 = vmatprep.subr.bf16.mxu0 0
    %1700 = vmatpush2.bf16.msra.mxu0 0
    %1701 = vmatprep.subr.bf16.mxu0 0
    %1702 = vmatpush2.bf16.msra.mxu0 0
    %1703 = vmatprep.subr.bf16.mxu0 0
    %1704 = vmatpush2.bf16.msra.mxu0 0
    %1705 = vmatprep.subr.bf16.mxu0 0
    %1706 = vmatpush2.bf16.msra.mxu0 0
    %1707 = vmatprep.subr.bf16.mxu0 0
    %1708 = vmatpush2.bf16.msra.mxu0 0
    %1709 = vmatprep.mubr.bf16.mxu0 0
    %1710 = vmatmul.mubr.bf16.gmra.mxu0 %v1676
    %v1711 = vpop.f32.mrf.mxu0
    %v1712 = vadd.f32 %v1509, %v1711
    %v1713 = vpop.f32.mrf.mxu0
    %v1714 = vpop.f32.mrf.mxu0
    %v1715 = vpop.f32.mrf.mxu0
    %1716 = vdwg.mxu0
    %v1717 = vadd.f32 %v1675, %v1712
    %v1718 = vxor.u32 %v1717, 2147483648
    %v1719 = vmul.f32 %v1718, 1.442695
    %v1720 = vpow.pop %v1719
    %v1721 = vadd.f32 %v1720, 1.0
    %v1722 = vrcp.pop %v1721
    %v1723 = vmul.f32 1.0, %v1722
    %1724 = vrot.lane.b32.xlu0 %v1723, 32
    %v1725 = vpop.permute.xlu0 %1724
    %v1726 = vmul.f32 %v1725, %v1712
    %v1727 = vadd.f32 %v1675, %v1726
    %v1728 = vtanh.pop %v1727
    %1729 = vrot.lane.b32.xlu0 %v1728, 32
    %v1730 = vpop.permute.xlu0 %1729
    %v1731 = vsub.f32 %v1674, %v1730
    %v1732 = vmul.f32 %v1723, %v1731
    %v1733 = vadd.f32 %v1730, %v1732
    %v1734 = vld [vmem:[%s681] sm:$0xff]
    %v1735 = vpack.c.bf16 %v1733, %v1733
    %1736 = vmatprep.subr.bf16.mxu0 0
    %1737 = vmatpush1.bf16.msra.mxu0 %v1550
    %1738 = vmatprep.subr.bf16.mxu0 0
    %1739 = vmatpush1.bf16.msra.mxu0 %v1549
    %1740 = vmatprep.subr.bf16.mxu0 0
    %1741 = vmatpush1.bf16.msra.mxu0 %v1548
    %1742 = vmatprep.subr.bf16.mxu0 0
    %1743 = vmatpush1.bf16.msra.mxu0 %v1547
    %1744 = vmatprep.subr.bf16.mxu0 0
    %1745 = vmatpush1.bf16.msra.mxu0 %v1546
    %1746 = vmatprep.subr.bf16.mxu0 0
    %1747 = vmatpush1.bf16.msra.mxu0 %v1545
    %1748 = vmatprep.subr.bf16.mxu0 0
    %1749 = vmatpush1.bf16.msra.mxu0 %v1544
    %1750 = vmatprep.subr.bf16.mxu0 0
    %1751 = vmatpush1.bf16.msra.mxu0 %v1543
    %1752 = vmatprep.subr.bf16.mxu0 0
    %1753 = vmatpush2.bf16.msra.mxu0 0
    %1754 = vmatprep.subr.bf16.mxu0 0
    %1755 = vmatpush2.bf16.msra.mxu0 0
    %1756 = vmatprep.subr.bf16.mxu0 0
    %1757 = vmatpush2.bf16.msra.mxu0 0
    %1758 = vmatprep.subr.bf16.mxu0 0
    %1759 = vmatpush2.bf16.msra.mxu0 0
    %1760 = vmatprep.subr.bf16.mxu0 0
    %1761 = vmatpush2.bf16.msra.mxu0 0
    %1762 = vmatprep.subr.bf16.mxu0 0
    %1763 = vmatpush2.bf16.msra.mxu0 0
    %1764 = vmatprep.subr.bf16.mxu0 0
    %1765 = vmatpush2.bf16.msra.mxu0 0
    %1766 = vmatprep.subr.bf16.mxu0 0
    %1767 = vmatpush2.bf16.msra.mxu0 0
    %1768 = vmatprep.mubr.bf16.mxu0 0
    %1769 = vmatmul.mubr.bf16.gmra.mxu0 %v1735
    %v1770 = vpop.f32.mrf.mxu0
    %v1771 = vadd.f32 %v1509, %v1770
    %v1772 = vpop.f32.mrf.mxu0
    %v1773 = vpop.f32.mrf.mxu0
    %v1774 = vpop.f32.mrf.mxu0
    %1775 = vdwg.mxu0
    %v1776 = vadd.f32 %v1734, %v1771
    %v1777 = vxor.u32 %v1776, 2147483648
    %v1778 = vmul.f32 %v1777, 1.442695
    %v1779 = vpow.pop %v1778
    %v1780 = vadd.f32 %v1779, 1.0
    %v1781 = vrcp.pop %v1780
    %v1782 = vmul.f32 1.0, %v1781
    %1783 = vrot.lane.b32.xlu0 %v1782, 32
    %v1784 = vpop.permute.xlu0 %1783
    %v1785 = vmul.f32 %v1784, %v1771
    %v1786 = vadd.f32 %v1734, %v1785
    %v1787 = vtanh.pop %v1786
    %1788 = vrot.lane.b32.xlu0 %v1787, 32
    %v1789 = vpop.permute.xlu0 %1788
    %v1790 = vsub.f32 %v1733, %v1789
    %v1791 = vmul.f32 %v1782, %v1790
    %v1792 = vadd.f32 %v1789, %v1791
    %v1793 = vld [vmem:[%s807] sm:$0xff]
    %v1794 = vpack.c.bf16 %v1792, %v1792
    %1795 = vmatprep.subr.bf16.mxu0 0
    %1796 = vmatpush1.bf16.msra.mxu0 %v1550
    %1797 = vmatprep.subr.bf16.mxu0 0
    %1798 = vmatpush1.bf16.msra.mxu0 %v1549
    %1799 = vmatprep.subr.bf16.mxu0 0
    %1800 = vmatpush1.bf16.msra.mxu0 %v1548
    %1801 = vmatprep.subr.bf16.mxu0 0
    %1802 = vmatpush1.bf16.msra.mxu0 %v1547
    %1803 = vmatprep.subr.bf16.mxu0 0
    %1804 = vmatpush1.bf16.msra.mxu0 %v1546
    %1805 = vmatprep.subr.bf16.mxu0 0
    %1806 = vmatpush1.bf16.msra.mxu0 %v1545
    %1807 = vmatprep.subr.bf16.mxu0 0
    %1808 = vmatpush1.bf16.msra.mxu0 %v1544
    %1809 = vmatprep.subr.bf16.mxu0 0
    %1810 = vmatpush1.bf16.msra.mxu0 %v1543
    %1811 = vmatprep.subr.bf16.mxu0 0
    %1812 = vmatpush2.bf16.msra.mxu0 0
    %1813 = vmatprep.subr.bf16.mxu0 0
    %1814 = vmatpush2.bf16.msra.mxu0 0
    %1815 = vmatprep.subr.bf16.mxu0 0
    %1816 = vmatpush2.bf16.msra.mxu0 0
    %1817 = vmatprep.subr.bf16.mxu0 0
    %1818 = vmatpush2.bf16.msra.mxu0 0
    %1819 = vmatprep.subr.bf16.mxu0 0
    %1820 = vmatpush2.bf16.msra.mxu0 0
    %1821 = vmatprep.subr.bf16.mxu0 0
    %1822 = vmatpush2.bf16.msra.mxu0 0
    %1823 = vmatprep.subr.bf16.mxu0 0
    %1824 = vmatpush2.bf16.msra.mxu0 0
    %1825 = vmatprep.subr.bf16.mxu0 0
    %1826 = vmatpush2.bf16.msra.mxu0 0
    %1827 = vmatprep.mubr.bf16.mxu0 0
    %1828 = vmatmul.mubr.bf16.gmra.mxu0 %v1794
    %v1829 = vpop.f32.mrf.mxu0
    %v1830 = vadd.f32 %v1509, %v1829
    %v1831 = vpop.f32.mrf.mxu0
    %v1832 = vpop.f32.mrf.mxu0
    %v1833 = vpop.f32.mrf.mxu0
    %1834 = vdwg.mxu0
    %v1835 = vadd.f32 %v1793, %v1830
    %v1836 = vxor.u32 %v1835, 2147483648
    %v1837 = vmul.f32 %v1836, 1.442695
    %v1838 = vpow.pop %v1837
    %v1839 = vadd.f32 %v1838, 1.0
    %v1840 = vrcp.pop %v1839
    %v1841 = vmul.f32 1.0, %v1840
    %1842 = vrot.lane.b32.xlu0 %v1841, 32
    %v1843 = vpop.permute.xlu0 %1842
    %v1844 = vmul.f32 %v1843, %v1830
    %v1845 = vadd.f32 %v1793, %v1844
    %v1846 = vtanh.pop %v1845
    %1847 = vrot.lane.b32.xlu0 %v1846, 32
    %v1848 = vpop.permute.xlu0 %1847
    %v1849 = vsub.f32 %v1792, %v1848
    %v1850 = vmul.f32 %v1841, %v1849
    %v1851 = vadd.f32 %v1848, %v1850
    %v1852 = vld [vmem:[%s933] sm:$0xff]
    %v1853 = vpack.c.bf16 %v1851, %v1851
    %1854 = vmatprep.subr.bf16.mxu0 0
    %1855 = vmatpush1.bf16.msra.mxu0 %v1550
    %1856 = vmatprep.subr.bf16.mxu0 0
    %1857 = vmatpush1.bf16.msra.mxu0 %v1549
    %1858 = vmatprep.subr.bf16.mxu0 0
    %1859 = vmatpush1.bf16.msra.mxu0 %v1548
    %1860 = vmatprep.subr.bf16.mxu0 0
    %1861 = vmatpush1.bf16.msra.mxu0 %v1547
    %1862 = vmatprep.subr.bf16.mxu0 0
    %1863 = vmatpush1.bf16.msra.mxu0 %v1546
    %1864 = vmatprep.subr.bf16.mxu0 0
    %1865 = vmatpush1.bf16.msra.mxu0 %v1545
    %1866 = vmatprep.subr.bf16.mxu0 0
    %1867 = vmatpush1.bf16.msra.mxu0 %v1544
    %1868 = vmatprep.subr.bf16.mxu0 0
    %1869 = vmatpush1.bf16.msra.mxu0 %v1543
    %1870 = vmatprep.subr.bf16.mxu0 0
    %1871 = vmatpush2.bf16.msra.mxu0 0
    %1872 = vmatprep.subr.bf16.mxu0 0
    %1873 = vmatpush2.bf16.msra.mxu0 0
    %1874 = vmatprep.subr.bf16.mxu0 0
    %1875 = vmatpush2.bf16.msra.mxu0 0
    %1876 = vmatprep.subr.bf16.mxu0 0
    %1877 = vmatpush2.bf16.msra.mxu0 0
    %1878 = vmatprep.subr.bf16.mxu0 0
    %1879 = vmatpush2.bf16.msra.mxu0 0
    %1880 = vmatprep.subr.bf16.mxu0 0
    %1881 = vmatpush2.bf16.msra.mxu0 0
    %1882 = vmatprep.subr.bf16.mxu0 0
    %1883 = vmatpush2.bf16.msra.mxu0 0
    %1884 = vmatprep.subr.bf16.mxu0 0
    %1885 = vmatpush2.bf16.msra.mxu0 0
    %1886 = vmatprep.mubr.bf16.mxu0 0
    %1887 = vmatmul.mubr.bf16.gmra.mxu0 %v1853
    %v1888 = vpop.f32.mrf.mxu0
    %v1889 = vadd.f32 %v1509, %v1888
    %v1890 = vpop.f32.mrf.mxu0
    %v1891 = vpop.f32.mrf.mxu0
    %v1892 = vpop.f32.mrf.mxu0
    %1893 = vdwg.mxu0
    %v1894 = vadd.f32 %v1852, %v1889
    %v1895 = vxor.u32 %v1894, 2147483648
    %v1896 = vmul.f32 %v1895, 1.442695
    %v1897 = vpow.pop %v1896
    %v1898 = vadd.f32 %v1897, 1.0
    %v1899 = vrcp.pop %v1898
    %v1900 = vmul.f32 1.0, %v1899
    %1901 = vrot.lane.b32.xlu0 %v1900, 32
    %v1902 = vpop.permute.xlu0 %1901
    %v1903 = vmul.f32 %v1902, %v1889
    %v1904 = vadd.f32 %v1852, %v1903
    %v1905 = vtanh.pop %v1904
    %1906 = vrot.lane.b32.xlu0 %v1905, 32
    %v1907 = vpop.permute.xlu0 %1906
    %v1908 = vsub.f32 %v1851, %v1907
    %v1909 = vmul.f32 %v1900, %v1908
    %v1910 = vadd.f32 %v1907, %v1909
    %v1911 = vld [vmem:[%s1059] sm:$0xff]
    %v1912 = vpack.c.bf16 %v1910, %v1910
    %1913 = vmatprep.subr.bf16.mxu0 0
    %1914 = vmatpush1.bf16.msra.mxu0 %v1550
    %1915 = vmatprep.subr.bf16.mxu0 0
    %1916 = vmatpush1.bf16.msra.mxu0 %v1549
    %1917 = vmatprep.subr.bf16.mxu0 0
    %1918 = vmatpush1.bf16.msra.mxu0 %v1548
    %1919 = vmatprep.subr.bf16.mxu0 0
    %1920 = vmatpush1.bf16.msra.mxu0 %v1547
    %1921 = vmatprep.subr.bf16.mxu0 0
    %1922 = vmatpush1.bf16.msra.mxu0 %v1546
    %1923 = vmatprep.subr.bf16.mxu0 0
    %1924 = vmatpush1.bf16.msra.mxu0 %v1545
    %1925 = vmatprep.subr.bf16.mxu0 0
    %1926 = vmatpush1.bf16.msra.mxu0 %v1544
    %1927 = vmatprep.subr.bf16.mxu0 0
    %1928 = vmatpush1.bf16.msra.mxu0 %v1543
    %1929 = vmatprep.subr.bf16.mxu0 0
    %1930 = vmatpush2.bf16.msra.mxu0 0
    %1931 = vmatprep.subr.bf16.mxu0 0
    %1932 = vmatpush2.bf16.msra.mxu0 0
    %1933 = vmatprep.subr.bf16.mxu0 0
    %1934 = vmatpush2.bf16.msra.mxu0 0
    %1935 = vmatprep.subr.bf16.mxu0 0
    %1936 = vmatpush2.bf16.msra.mxu0 0
    %1937 = vmatprep.subr.bf16.mxu0 0
    %1938 = vmatpush2.bf16.msra.mxu0 0
    %1939 = vmatprep.subr.bf16.mxu0 0
    %1940 = vmatpush2.bf16.msra.mxu0 0
    %1941 = vmatprep.subr.bf16.mxu0 0
    %1942 = vmatpush2.bf16.msra.mxu0 0
    %1943 = vmatprep.subr.bf16.mxu0 0
    %1944 = vmatpush2.bf16.msra.mxu0 0
    %1945 = vmatprep.mubr.bf16.mxu0 0
    %1946 = vmatmul.mubr.bf16.gmra.mxu0 %v1912
    %v1947 = vpop.f32.mrf.mxu0
    %v1948 = vadd.f32 %v1509, %v1947
    %v1949 = vpop.f32.mrf.mxu0
    %v1950 = vpop.f32.mrf.mxu0
    %v1951 = vpop.f32.mrf.mxu0
    %1952 = vdwg.mxu0
    %v1953 = vadd.f32 %v1911, %v1948
    %v1954 = vxor.u32 %v1953, 2147483648
    %v1955 = vmul.f32 %v1954, 1.442695
    %v1956 = vpow.pop %v1955
    %v1957 = vadd.f32 %v1956, 1.0
    %v1958 = vrcp.pop %v1957
    %v1959 = vmul.f32 1.0, %v1958
    %1960 = vrot.lane.b32.xlu0 %v1959, 32
    %v1961 = vpop.permute.xlu0 %1960
    %v1962 = vmul.f32 %v1961, %v1948
    %v1963 = vadd.f32 %v1911, %v1962
    %v1964 = vtanh.pop %v1963
    %1965 = vrot.lane.b32.xlu0 %v1964, 32
    %v1966 = vpop.permute.xlu0 %1965
    %v1967 = vsub.f32 %v1910, %v1966
    %v1968 = vmul.f32 %v1959, %v1967
    %v1969 = vadd.f32 %v1966, %v1968
    %v1970 = vld [vmem:[%s1185] sm:$0xff]
    %v1971 = vpack.c.bf16 %v1969, %v1969
    %1972 = vmatprep.subr.bf16.mxu0 0
    %1973 = vmatpush1.bf16.msra.mxu0 %v1550
    %1974 = vmatprep.subr.bf16.mxu0 0
    %1975 = vmatpush1.bf16.msra.mxu0 %v1549
    %1976 = vmatprep.subr.bf16.mxu0 0
    %1977 = vmatpush1.bf16.msra.mxu0 %v1548
    %1978 = vmatprep.subr.bf16.mxu0 0
    %1979 = vmatpush1.bf16.msra.mxu0 %v1547
    %1980 = vmatprep.subr.bf16.mxu0 0
    %1981 = vmatpush1.bf16.msra.mxu0 %v1546
    %1982 = vmatprep.subr.bf16.mxu0 0
    %1983 = vmatpush1.bf16.msra.mxu0 %v1545
    %1984 = vmatprep.subr.bf16.mxu0 0
    %1985 = vmatpush1.bf16.msra.mxu0 %v1544
    %1986 = vmatprep.subr.bf16.mxu0 0
    %1987 = vmatpush1.bf16.msra.mxu0 %v1543
    %1988 = vmatprep.subr.bf16.mxu0 0
    %1989 = vmatpush2.bf16.msra.mxu0 0
    %1990 = vmatprep.subr.bf16.mxu0 0
    %1991 = vmatpush2.bf16.msra.mxu0 0
    %1992 = vmatprep.subr.bf16.mxu0 0
    %1993 = vmatpush2.bf16.msra.mxu0 0
    %1994 = vmatprep.subr.bf16.mxu0 0
    %1995 = vmatpush2.bf16.msra.mxu0 0
    %1996 = vmatprep.subr.bf16.mxu0 0
    %1997 = vmatpush2.bf16.msra.mxu0 0
    %1998 = vmatprep.subr.bf16.mxu0 0
    %1999 = vmatpush2.bf16.msra.mxu0 0
    %2000 = vmatprep.subr.bf16.mxu0 0
    %2001 = vmatpush2.bf16.msra.mxu0 0
    %2002 = vmatprep.subr.bf16.mxu0 0
    %2003 = vmatpush2.bf16.msra.mxu0 0
    %2004 = vmatprep.mubr.bf16.mxu0 0
    %2005 = vmatmul.mubr.bf16.gmra.mxu0 %v1971
    %v2006 = vpop.f32.mrf.mxu0
    %v2007 = vadd.f32 %v1509, %v2006
    %v2008 = vpop.f32.mrf.mxu0
    %v2009 = vpop.f32.mrf.mxu0
    %v2010 = vpop.f32.mrf.mxu0
    %2011 = vdwg.mxu0
    %v2012 = vadd.f32 %v1970, %v2007
    %v2013 = vxor.u32 %v2012, 2147483648
    %v2014 = vmul.f32 %v2013, 1.442695
    %v2015 = vpow.pop %v2014
    %v2016 = vadd.f32 %v2015, 1.0
    %v2017 = vrcp.pop %v2016
    %v2018 = vmul.f32 1.0, %v2017
    %2019 = vrot.lane.b32.xlu0 %v2018, 32
    %v2020 = vpop.permute.xlu0 %2019
    %v2021 = vmul.f32 %v2020, %v2007
    %v2022 = vadd.f32 %v1970, %v2021
    %v2023 = vtanh.pop %v2022
    %2024 = vrot.lane.b32.xlu0 %v2023, 32
    %v2025 = vpop.permute.xlu0 %2024
    %v2026 = vsub.f32 %v1969, %v2025
    %v2027 = vmul.f32 %v2018, %v2026
    %v2028 = vadd.f32 %v2025, %v2027
    %v2029 = vld [vmem:[#allocation13] sm:$0xff]
    %v2030 = vld [vmem:[#allocation13 + $0x8] sm:$0xff]
    %v2031 = vld [vmem:[#allocation13 + $0x10] sm:$0xff]
    %v2032 = vld [vmem:[#allocation13 + $0x18] sm:$0xff]
    %v2033 = vld [vmem:[#allocation13 + $0x20] sm:$0xff]
    %v2034 = vld [vmem:[#allocation13 + $0x28] sm:$0xff]
    %v2035 = vld [vmem:[#allocation13 + $0x30] sm:$0xff]
    %v2036 = vld [vmem:[#allocation13 + $0x38] sm:$0xff]
    %v2037 = vld [vmem:[#allocation13 + $0x40] sm:$0xff]
    %v2038 = vld [vmem:[#allocation13 + $0x48] sm:$0xff]
    %v2039 = vld [vmem:[#allocation13 + $0x50] sm:$0xff]
    %v2040 = vld [vmem:[#allocation13 + $0x58] sm:$0xff]
    %v2041 = vld [vmem:[#allocation13 + $0x60] sm:$0xff]
    %v2042 = vld [vmem:[#allocation13 + $0x68] sm:$0xff]
    %v2043 = vld [vmem:[#allocation13 + $0x70] sm:$0xff]
    %v2044 = vld [vmem:[#allocation13 + $0x78] sm:$0xff]
    %v2045 = vld [vmem:[%s10] sm:$0x1]
    %v2047 = vlaneseq
    %v2048 = vshrl.u32 %v2047, 7
    %v2049 = vsub.s32 0, %v2048
    %v2050 = vrot.slane %v2045, %v2049
    %2052 = vmatprep.subr.mxu0 0.0
    %2053 = vmatpush1.msra.mxu0 %v2044
    %2054 = vmatprep.subr.mxu0 0.0
    %2055 = vmatpush1.msra.mxu0 %v2043
    %2056 = vmatprep.subr.mxu0 0.0
    %2057 = vmatpush1.msra.mxu0 %v2042
    %2058 = vmatprep.subr.mxu0 0.0
    %2059 = vmatpush1.msra.mxu0 %v2041
    %2060 = vmatprep.subr.mxu0 0.0
    %2061 = vmatpush1.msra.mxu0 %v2040
    %2062 = vmatprep.subr.mxu0 0.0
    %2063 = vmatpush1.msra.mxu0 %v2039
    %2064 = vmatprep.subr.mxu0 0.0
    %2065 = vmatpush1.msra.mxu0 %v2038
    %2066 = vmatprep.subr.mxu0 0.0
    %2067 = vmatpush1.msra.mxu0 %v2037
    %2068 = vmatprep.subr.mxu0 0.0
    %2069 = vmatpush1.msra.mxu0 %v2036
    %2070 = vmatprep.subr.mxu0 0.0
    %2071 = vmatpush1.msra.mxu0 %v2035
    %2072 = vmatprep.subr.mxu0 0.0
    %2073 = vmatpush1.msra.mxu0 %v2034
    %2074 = vmatprep.subr.mxu0 0.0
    %2075 = vmatpush1.msra.mxu0 %v2033
    %2076 = vmatprep.subr.mxu0 0.0
    %2077 = vmatpush1.msra.mxu0 %v2032
    %2078 = vmatprep.subr.mxu0 0.0
    %2079 = vmatpush1.msra.mxu0 %v2031
    %2080 = vmatprep.subr.mxu0 0.0
    %2081 = vmatpush1.msra.mxu0 %v2030
    %2082 = vmatprep.subr.mxu0 0.0
    %2083 = vmatpush1.msra.mxu0 %v2029
    %2084 = vmatprep.subr.mxu0 0.0
    %2085 = vmatpush2.msra.mxu0 0.0
    %2086 = vmatprep.subr.mxu0 0.0
    %2087 = vmatpush2.msra.mxu0 0.0
    %2088 = vmatprep.subr.mxu0 0.0
    %2089 = vmatpush2.msra.mxu0 0.0
    %2090 = vmatprep.subr.mxu0 0.0
    %2091 = vmatpush2.msra.mxu0 0.0
    %2092 = vmatprep.subr.mxu0 0.0
    %2093 = vmatpush2.msra.mxu0 0.0
    %2094 = vmatprep.subr.mxu0 0.0
    %2095 = vmatpush2.msra.mxu0 0.0
    %2096 = vmatprep.subr.mxu0 0.0
    %2097 = vmatpush2.msra.mxu0 0.0
    %2098 = vmatprep.subr.mxu0 0.0
    %2099 = vmatpush2.msra.mxu0 0.0
    %2100 = vmatprep.subr.mxu0 0.0
    %2101 = vmatpush2.msra.mxu0 0.0
    %2102 = vmatprep.subr.mxu0 0.0
    %2103 = vmatpush2.msra.mxu0 0.0
    %2104 = vmatprep.subr.mxu0 0.0
    %2105 = vmatpush2.msra.mxu0 0.0
    %2106 = vmatprep.subr.mxu0 0.0
    %2107 = vmatpush2.msra.mxu0 0.0
    %2108 = vmatprep.subr.mxu0 0.0
    %2109 = vmatpush2.msra.mxu0 0.0
    %2110 = vmatprep.subr.mxu0 0.0
    %2111 = vmatpush2.msra.mxu0 0.0
    %2112 = vmatprep.subr.mxu0 0.0
    %2113 = vmatpush2.msra.mxu0 0.0
    %2114 = vmatprep.subr.mxu0 0.0
    %2115 = vmatpush2.msra.mxu0 0.0
    %2116 = vmatprep.mubr.f32.mxu0 0.0
    %2117 = vmatmul.mubr.f32.gmra.mxu0 %v2028
    %v2118 = vpop.f32.mrf.mxu0
    %v2119 = vadd.f32 %v2050, %v2118
    %v2120 = vpop.f32.mrf.mxu0
    %2121 = vdwg.mxu0
    %2122 = vst [vmem:[#allocation15] sm:$0xff] %v2119
    // Predicated region
    $region70: #{tpu_custom_call.1} parent=1 // pred_check
      _
    $region71: #{tpu_custom_call.1} parent=1 // pred_check_branch
      %2124 = sbr.rel (0) target = $region73
    $region72: #{tpu_custom_call.1} parent=1 // pred_region
      %s2126 = ssub.s32 128, 128
      %2127 = vsyncadd [#allocation6], %s2126
      %s2129 = sshll.u32 [#allocation15], 4
      %s2130 = int_to_ptr.vmem [resolvable:$true] %s2129
      %2132 = dma.vmem_to_hbm [thread:$0]  %s2130, 128, %s11, [#allocation6]
    $region73: #{tpu_custom_call.1} parent=1 // pred_fallthru
      _
    // Predicated region
    $region74: #{tpu_custom_call.1} parent=1 // pred_check
      _
    $region75: #{tpu_custom_call.1} parent=1 // pred_check_branch
      %2134 = sbr.rel (0) target = $region77
    $region76: #{tpu_custom_call.1} parent=1 // pred_region
      %2135 = dma.done [#allocation6], 128
    $region77: #{tpu_custom_call.1} parent=1 // pred_fallthru
      _
    %2136 = vsyncpa [#allocation5], 1
    %2137 = vsyncpa [#allocation8], 1
    %2138 = vsyncpa [#allocation11], 1
    %2139 = vsyncpa [#allocation14], 1
    %2140 = vsyncpa [#allocation6], 1

</llo_original>
